<compile_context>
chip_gen: v7x
topology: tpu7x:2x2x1
jax: 0.10.0
libtpu: 0.0.40
codegen_flags: <defaults>
</compile_context>

<pallas_src>
import functools

import jax
import jax.numpy as jnp
from jax.experimental import pallas as pl
from jax.experimental.pallas import tpu as pltpu


def _round_up(x: int, m: int) -> int:
    return (x + m - 1) // m * m


def _ae_kernel(x_ref,
               w1_ref, b1_ref, w2_ref, b2_ref, w3_ref, b3_ref,
               w4_ref, b4_ref, w5_ref, b5_ref, w6_ref, b6_ref,
               o_ref, *, matmul_dtype):
    """Fused encoder+decoder: 6 x (Linear -> ReLU) on one (TB, D) batch tile."""
    h = x_ref[...]                                    # f32 (TB, D)
    layers = ((w1_ref, b1_ref), (w2_ref, b2_ref), (w3_ref, b3_ref),
              (w4_ref, b4_ref), (w5_ref, b5_ref), (w6_ref, b6_ref))
    for w_ref, b_ref in layers:
        # MXU matmul: optionally bf16 inputs, always f32 accumulation.
        lhs = h.astype(matmul_dtype)
        rhs = w_ref[...].astype(matmul_dtype)
        h = jnp.dot(lhs, rhs, preferred_element_type=jnp.float32)
        # Bias + ReLU epilogue kept in f32 (VPU-friendly on v5e too).
        h = jnp.maximum(h + b_ref[...], 0.0)
    o_ref[...] = h.astype(o_ref.dtype)


@functools.partial(jax.jit, static_argnames=("tb", "matmul_dtype"))
def autoencoder_forward(x_nchw, params, *, tb=256, matmul_dtype=jnp.float32):
    """x_nchw: (B, C, H, W) float32. params: list of 6 (W(in,out), b(1,out))."""
    B, C, H, W = x_nchw.shape
    D = C * H * W
    x_flat = x_nchw.reshape(B, D)

    # Batch tile: multiple of 8 (f32 sublanes); pad B so the grid covers it
    # exactly (no partial blocks, no OOB reads). For large B this settles at
    # tb=256 rows, which fills the MXU and keeps VMEM usage ~4-5 MiB total
    # (well inside the default scoped limit on v5e/v6e/v7x).
    tb = max(8, min(int(tb), _round_up(B, 8)))
    b_pad = _round_up(B, tb)
    if b_pad != B:
        x_flat = jnp.pad(x_flat, ((0, b_pad - B), (0, 0)))

    flat_args = []
    for w, b in params:
        flat_args.append(w)
        flat_args.append(b)

    # Weights/biases: full-array blocks, constant index_map -> DMA'd once,
    # resident in VMEM across all batch-tile grid steps.
    weight_specs = [pl.BlockSpec(a.shape, lambda i: (0, 0)) for a in flat_args]

    # Advisory cost estimate for XLA's scheduler.
    flops = sum(2 * b_pad * w.shape[0] * w.shape[1] for w, _ in params)
    bytes_accessed = (sum(a.size * a.dtype.itemsize for a in flat_args)
                      + 2 * b_pad * D * 4)

    out_flat = pl.pallas_call(
        functools.partial(_ae_kernel, matmul_dtype=matmul_dtype),
        out_shape=jax.ShapeDtypeStruct((b_pad, D), jnp.float32),
        grid=(b_pad // tb,),
        in_specs=[pl.BlockSpec((tb, D), lambda i: (i, 0))] + weight_specs,
        out_specs=pl.BlockSpec((tb, D), lambda i: (i, 0)),
        compiler_params=pltpu.CompilerParams(
            dimension_semantics=("parallel",)),
        cost_estimate=pl.CostEstimate(
            flops=flops, transcendentals=0, bytes_accessed=bytes_accessed),
    )(x_flat, *flat_args)

    if b_pad != B:
        out_flat = out_flat[:B]
    return out_flat.reshape(B, C, H, W)


def init_autoencoder_params(key, input_dim, hidden_dim1, hidden_dim2, latent_dim):
    """Deterministic init mirroring nn.Linear default U(-1/sqrt(fan_in), +).

    Weights stored as (in_features, out_features) so the kernel does x @ W.
    Biases stored as (1, out_features).
    """
    dims = [input_dim, hidden_dim1, hidden_dim2, latent_dim,   # encoder
            hidden_dim2, hidden_dim1, input_dim]               # decoder
    params = []
    for i in range(6):
        fan_in, fan_out = dims[i], dims[i + 1]
        key, kw, kb = jax.random.split(key, 3)
        bound = 1.0 / jnp.sqrt(jnp.float32(fan_in))
        w = jax.random.uniform(kw, (fan_in, fan_out), jnp.float32, -bound, bound)
        b = jax.random.uniform(kb, (1, fan_out), jnp.float32, -bound, bound)
        params.append((w, b))
    return params


def _reference_forward(x_nchw, params):
    """Pure-JAX reference for correctness checking."""
    B = x_nchw.shape[0]
    h = x_nchw.reshape(B, -1)
    for w, b in params:
        h = jnp.maximum(h @ w + b, 0.0)
    return h.reshape(x_nchw.shape)


if __name__ == "__main__":
    # Shapes consistent with the module: flattened image dim = C*H*W.
    B, C, H, W = 2, 4, 16, 16
    input_dim = C * H * W          # 1024
    hidden_dim1 = 128
    hidden_dim2 = 64
    latent_dim = 32

    key = jax.random.PRNGKey(0)
    key, kx = jax.random.split(key)
    x = jax.random.normal(kx, (B, C, H, W), dtype=jnp.float32)

    params = init_autoencoder_params(key, input_dim, hidden_dim1,
                                     hidden_dim2, latent_dim)

    # Primary run at the spec'd small shape (single grid step, padded to 8 rows).
    out = autoencoder_forward(x, params)
    out = jax.block_until_ready(out)
    ref = _reference_forward(x, params)
    assert out.shape == x.shape and out.dtype == x.dtype
    assert jnp.allclose(out, ref, atol=1e-4, rtol=1e-4), "mismatch vs reference"

    # Secondary check exercising the multi-tile gridded path (resident weights
    # across grid steps): B=16 with tb=8 -> grid of 2 batch tiles.
    key, kx2 = jax.random.split(key)
    x2 = jax.random.normal(kx2, (16, C, H, W), dtype=jnp.float32)
    out2 = jax.block_until_ready(autoencoder_forward(x2, params, tb=8))
    ref2 = _reference_forward(x2, params)
    assert jnp.allclose(out2, ref2, atol=1e-4, rtol=1e-4), "multi-tile mismatch"

    print("KERNEL_OK")
</pallas_src>

<mosaic_0001>
module attributes {stable_mosaic.version = 11 : i64} {
  func.func @_ae_kernel(%arg0: i32, %arg1: memref<8x1024xf32, #tpu.memory_space<vmem>>, %arg2: memref<1024x128xf32, #tpu.memory_space<vmem>>, %arg3: memref<1x128xf32, #tpu.memory_space<vmem>>, %arg4: memref<128x64xf32, #tpu.memory_space<vmem>>, %arg5: memref<1x64xf32, #tpu.memory_space<vmem>>, %arg6: memref<64x32xf32, #tpu.memory_space<vmem>>, %arg7: memref<1x32xf32, #tpu.memory_space<vmem>>, %arg8: memref<32x64xf32, #tpu.memory_space<vmem>>, %arg9: memref<1x64xf32, #tpu.memory_space<vmem>>, %arg10: memref<64x128xf32, #tpu.memory_space<vmem>>, %arg11: memref<1x128xf32, #tpu.memory_space<vmem>>, %arg12: memref<128x1024xf32, #tpu.memory_space<vmem>>, %arg13: memref<1x1024xf32, #tpu.memory_space<vmem>>, %arg14: memref<8x1024xf32, #tpu.memory_space<vmem>>) attributes {dimension_semantics = [#tpu.dimension_semantics<parallel>], iteration_bounds = array<i64: 1>, scalar_prefetch = 0 : i64, scratch_operands = 0 : i64, tpu.core_type = #tpu.core_type<tc>, window_params = [{transform_indices = @transform_0, window_bounds = array<i64: 8, 1024>}, {pipeline_mode = #tpu.pipeline_mode<synchronous>, transform_indices = @transform_1, window_bounds = array<i64: 1024, 128>}, {pipeline_mode = #tpu.pipeline_mode<synchronous>, transform_indices = @transform_2, window_bounds = array<i64: 1, 128>}, {pipeline_mode = #tpu.pipeline_mode<synchronous>, transform_indices = @transform_3, window_bounds = array<i64: 128, 64>}, {pipeline_mode = #tpu.pipeline_mode<synchronous>, transform_indices = @transform_4, window_bounds = array<i64: 1, 64>}, {pipeline_mode = #tpu.pipeline_mode<synchronous>, transform_indices = @transform_5, window_bounds = array<i64: 64, 32>}, {pipeline_mode = #tpu.pipeline_mode<synchronous>, transform_indices = @transform_6, window_bounds = array<i64: 1, 32>}, {pipeline_mode = #tpu.pipeline_mode<synchronous>, transform_indices = @transform_7, window_bounds = array<i64: 32, 64>}, {pipeline_mode = #tpu.pipeline_mode<synchronous>, transform_indices = @transform_8, window_bounds = array<i64: 1, 64>}, {pipeline_mode = #tpu.pipeline_mode<synchronous>, transform_indices = @transform_9, window_bounds = array<i64: 64, 128>}, {pipeline_mode = #tpu.pipeline_mode<synchronous>, transform_indices = @transform_10, window_bounds = array<i64: 1, 128>}, {pipeline_mode = #tpu.pipeline_mode<synchronous>, transform_indices = @transform_11, window_bounds = array<i64: 128, 1024>}, {pipeline_mode = #tpu.pipeline_mode<synchronous>, transform_indices = @transform_12, window_bounds = array<i64: 1, 1024>}, {transform_indices = @transform_13, window_bounds = array<i64: 8, 1024>}]} {
    %c0 = arith.constant 0 : index
    %c0_0 = arith.constant 0 : index
    %0 = vector.load %arg1[%c0, %c0_0] : memref<8x1024xf32, #tpu.memory_space<vmem>>, vector<8x1024xf32>
    %c0_1 = arith.constant 0 : index
    %c0_2 = arith.constant 0 : index
    %1 = vector.load %arg2[%c0_1, %c0_2] : memref<1024x128xf32, #tpu.memory_space<vmem>>, vector<1024x128xf32>
    %cst = arith.constant dense<0.000000e+00> : vector<8x128xf32>
    %2 = tpu.matmul %0, %1, %cst {dimension_numbers = #tpu.dot_dimension_numbers<[1], [0], [0], [1], [0, 0, 1, 1], [], []>} : vector<8x1024xf32>, vector<1024x128xf32>, vector<8x128xf32> -> vector<8x128xf32>
    %c0_3 = arith.constant 0 : index
    %c0_4 = arith.constant 0 : index
    %3 = vector.load %arg3[%c0_3, %c0_4] : memref<1x128xf32, #tpu.memory_space<vmem>>, vector<1x128xf32>
    %4 = vector.broadcast %3 : vector<1x128xf32> to vector<8x128xf32>
    %5 = arith.addf %2, %4 : vector<8x128xf32>
    %cst_5 = arith.constant 0.000000e+00 : f32
    %6 = vector.broadcast %cst_5 : f32 to vector<8x128xf32>
    %7 = arith.maximumf %5, %6 : vector<8x128xf32>
    %c0_6 = arith.constant 0 : index
    %c0_7 = arith.constant 0 : index
    %8 = vector.load %arg4[%c0_6, %c0_7] : memref<128x64xf32, #tpu.memory_space<vmem>>, vector<128x64xf32>
    %cst_8 = arith.constant dense<0.000000e+00> : vector<8x64xf32>
    %9 = tpu.matmul %7, %8, %cst_8 {dimension_numbers = #tpu.dot_dimension_numbers<[1], [0], [0], [1], [0, 0, 1, 1], [], []>} : vector<8x128xf32>, vector<128x64xf32>, vector<8x64xf32> -> vector<8x64xf32>
    %c0_9 = arith.constant 0 : index
    %c0_10 = arith.constant 0 : index
    %10 = vector.load %arg5[%c0_9, %c0_10] : memref<1x64xf32, #tpu.memory_space<vmem>>, vector<1x64xf32>
    %11 = vector.broadcast %10 : vector<1x64xf32> to vector<8x64xf32>
    %12 = arith.addf %9, %11 : vector<8x64xf32>
    %cst_11 = arith.constant 0.000000e+00 : f32
    %13 = vector.broadcast %cst_11 : f32 to vector<8x64xf32>
    %14 = arith.maximumf %12, %13 : vector<8x64xf32>
    %c0_12 = arith.constant 0 : index
    %c0_13 = arith.constant 0 : index
    %15 = vector.load %arg6[%c0_12, %c0_13] : memref<64x32xf32, #tpu.memory_space<vmem>>, vector<64x32xf32>
    %cst_14 = arith.constant dense<0.000000e+00> : vector<8x32xf32>
    %16 = tpu.matmul %14, %15, %cst_14 {dimension_numbers = #tpu.dot_dimension_numbers<[1], [0], [0], [1], [0, 0, 1, 1], [], []>} : vector<8x64xf32>, vector<64x32xf32>, vector<8x32xf32> -> vector<8x32xf32>
    %c0_15 = arith.constant 0 : index
    %c0_16 = arith.constant 0 : index
    %17 = vector.load %arg7[%c0_15, %c0_16] : memref<1x32xf32, #tpu.memory_space<vmem>>, vector<1x32xf32>
    %18 = vector.broadcast %17 : vector<1x32xf32> to vector<8x32xf32>
    %19 = arith.addf %16, %18 : vector<8x32xf32>
    %cst_17 = arith.constant 0.000000e+00 : f32
    %20 = vector.broadcast %cst_17 : f32 to vector<8x32xf32>
    %21 = arith.maximumf %19, %20 : vector<8x32xf32>
    %c0_18 = arith.constant 0 : index
    %c0_19 = arith.constant 0 : index
    %22 = vector.load %arg8[%c0_18, %c0_19] : memref<32x64xf32, #tpu.memory_space<vmem>>, vector<32x64xf32>
    %cst_20 = arith.constant dense<0.000000e+00> : vector<8x64xf32>
    %23 = tpu.matmul %21, %22, %cst_20 {dimension_numbers = #tpu.dot_dimension_numbers<[1], [0], [0], [1], [0, 0, 1, 1], [], []>} : vector<8x32xf32>, vector<32x64xf32>, vector<8x64xf32> -> vector<8x64xf32>
    %c0_21 = arith.constant 0 : index
    %c0_22 = arith.constant 0 : index
    %24 = vector.load %arg9[%c0_21, %c0_22] : memref<1x64xf32, #tpu.memory_space<vmem>>, vector<1x64xf32>
    %25 = vector.broadcast %24 : vector<1x64xf32> to vector<8x64xf32>
    %26 = arith.addf %23, %25 : vector<8x64xf32>
    %cst_23 = arith.constant 0.000000e+00 : f32
    %27 = vector.broadcast %cst_23 : f32 to vector<8x64xf32>
    %28 = arith.maximumf %26, %27 : vector<8x64xf32>
    %c0_24 = arith.constant 0 : index
    %c0_25 = arith.constant 0 : index
    %29 = vector.load %arg10[%c0_24, %c0_25] : memref<64x128xf32, #tpu.memory_space<vmem>>, vector<64x128xf32>
    %cst_26 = arith.constant dense<0.000000e+00> : vector<8x128xf32>
    %30 = tpu.matmul %28, %29, %cst_26 {dimension_numbers = #tpu.dot_dimension_numbers<[1], [0], [0], [1], [0, 0, 1, 1], [], []>} : vector<8x64xf32>, vector<64x128xf32>, vector<8x128xf32> -> vector<8x128xf32>
    %c0_27 = arith.constant 0 : index
    %c0_28 = arith.constant 0 : index
    %31 = vector.load %arg11[%c0_27, %c0_28] : memref<1x128xf32, #tpu.memory_space<vmem>>, vector<1x128xf32>
    %32 = vector.broadcast %31 : vector<1x128xf32> to vector<8x128xf32>
    %33 = arith.addf %30, %32 : vector<8x128xf32>
    %cst_29 = arith.constant 0.000000e+00 : f32
    %34 = vector.broadcast %cst_29 : f32 to vector<8x128xf32>
    %35 = arith.maximumf %33, %34 : vector<8x128xf32>
    %c0_30 = arith.constant 0 : index
    %c0_31 = arith.constant 0 : index
    %36 = vector.load %arg12[%c0_30, %c0_31] : memref<128x1024xf32, #tpu.memory_space<vmem>>, vector<128x1024xf32>
    %cst_32 = arith.constant dense<0.000000e+00> : vector<8x1024xf32>
    %37 = tpu.matmul %35, %36, %cst_32 {dimension_numbers = #tpu.dot_dimension_numbers<[1], [0], [0], [1], [0, 0, 1, 1], [], []>} : vector<8x128xf32>, vector<128x1024xf32>, vector<8x1024xf32> -> vector<8x1024xf32>
    %c0_33 = arith.constant 0 : index
    %c0_34 = arith.constant 0 : index
    %38 = vector.load %arg13[%c0_33, %c0_34] : memref<1x1024xf32, #tpu.memory_space<vmem>>, vector<1x1024xf32>
    %39 = vector.broadcast %38 : vector<1x1024xf32> to vector<8x1024xf32>
    %40 = arith.addf %37, %39 : vector<8x1024xf32>
    %cst_35 = arith.constant 0.000000e+00 : f32
    %41 = vector.broadcast %cst_35 : f32 to vector<8x1024xf32>
    %42 = arith.maximumf %40, %41 : vector<8x1024xf32>
    %c0_36 = arith.constant 0 : index
    %c0_37 = arith.constant 0 : index
    %43 = vector.load %arg14[%c0_36, %c0_37] : memref<8x1024xf32, #tpu.memory_space<vmem>>, vector<8x1024xf32>
    tpu.vector_store %arg14[%c0_36, %c0_37], %42 {strides = array<i32>} : memref<8x1024xf32, #tpu.memory_space<vmem>>, vector<8x1024xf32>,
    return
  }
  func.func @transform_0(%arg0: i32) -> (i32, i32) {
    %c0_i32 = arith.constant 0 : i32
    %c0_i32_0 = arith.constant 0 : i32
    return %arg0, %c0_i32 : i32, i32
  }
  func.func @transform_1(%arg0: i32) -> (i32, i32) {
    %c0_i32 = arith.constant 0 : i32
    %c0_i32_0 = arith.constant 0 : i32
    %c0_i32_1 = arith.constant 0 : i32
    return %c0_i32, %c0_i32_0 : i32, i32
  }
  func.func @transform_2(%arg0: i32) -> (i32, i32) {
    %c0_i32 = arith.constant 0 : i32
    %c0_i32_0 = arith.constant 0 : i32
    %c0_i32_1 = arith.constant 0 : i32
    return %c0_i32, %c0_i32_0 : i32, i32
  }
  func.func @transform_3(%arg0: i32) -> (i32, i32) {
    %c0_i32 = arith.constant 0 : i32
    %c0_i32_0 = arith.constant 0 : i32
    %c0_i32_1 = arith.constant 0 : i32
    return %c0_i32, %c0_i32_0 : i32, i32
  }
  func.func @transform_4(%arg0: i32) -> (i32, i32) {
    %c0_i32 = arith.constant 0 : i32
    %c0_i32_0 = arith.constant 0 : i32
    %c0_i32_1 = arith.constant 0 : i32
    return %c0_i32, %c0_i32_0 : i32, i32
  }
  func.func @transform_5(%arg0: i32) -> (i32, i32) {
    %c0_i32 = arith.constant 0 : i32
    %c0_i32_0 = arith.constant 0 : i32
    %c0_i32_1 = arith.constant 0 : i32
    return %c0_i32, %c0_i32_0 : i32, i32
  }
  func.func @transform_6(%arg0: i32) -> (i32, i32) {
    %c0_i32 = arith.constant 0 : i32
    %c0_i32_0 = arith.constant 0 : i32
    %c0_i32_1 = arith.constant 0 : i32
    return %c0_i32, %c0_i32_0 : i32, i32
  }
  func.func @transform_7(%arg0: i32) -> (i32, i32) {
    %c0_i32 = arith.constant 0 : i32
    %c0_i32_0 = arith.constant 0 : i32
    %c0_i32_1 = arith.constant 0 : i32
    return %c0_i32, %c0_i32_0 : i32, i32
  }
  func.func @transform_8(%arg0: i32) -> (i32, i32) {
    %c0_i32 = arith.constant 0 : i32
    %c0_i32_0 = arith.constant 0 : i32
    %c0_i32_1 = arith.constant 0 : i32
    return %c0_i32, %c0_i32_0 : i32, i32
  }
  func.func @transform_9(%arg0: i32) -> (i32, i32) {
    %c0_i32 = arith.constant 0 : i32
    %c0_i32_0 = arith.constant 0 : i32
    %c0_i32_1 = arith.constant 0 : i32
    return %c0_i32, %c0_i32_0 : i32, i32
  }
  func.func @transform_10(%arg0: i32) -> (i32, i32) {
    %c0_i32 = arith.constant 0 : i32
    %c0_i32_0 = arith.constant 0 : i32
    %c0_i32_1 = arith.constant 0 : i32
    return %c0_i32, %c0_i32_0 : i32, i32
  }
  func.func @transform_11(%arg0: i32) -> (i32, i32) {
    %c0_i32 = arith.constant 0 : i32
    %c0_i32_0 = arith.constant 0 : i32
    %c0_i32_1 = arith.constant 0 : i32
    return %c0_i32, %c0_i32_0 : i32, i32
  }
  func.func @transform_12(%arg0: i32) -> (i32, i32) {
    %c0_i32 = arith.constant 0 : i32
    %c0_i32_0 = arith.constant 0 : i32
    %c0_i32_1 = arith.constant 0 : i32
    return %c0_i32, %c0_i32_0 : i32, i32
  }
  func.func @transform_13(%arg0: i32) -> (i32, i32) {
    %c0_i32 = arith.constant 0 : i32
    %c0_i32_0 = arith.constant 0 : i32
    return %arg0, %c0_i32 : i32, i32
  }
}

</mosaic_0001>

<llo_original>
// kernel: autoencoder_forward.1
$region0: #{autoencoder_forward.1}
  #allocation0 [shape = 'u32[]', space=smem, size = 0x4, offset = 0x4, fixed_abs, tag = 'smem constant byte address 0x4 - core index']
  #allocation1 [shape = 'u32[144,128]{1,0:T(1,128)}', space=vmem, size = 0x12000, scoped, tag = 'internal scratch']
  %s0 = inlined_call_operand.vmem [shape: f32[8,1024], index: 0, kind: input, shape index: {}]
  %s1 = inlined_call_operand.hbm [shape: f32[1024,128], index: 1, kind: input, shape index: {}]
  %s2 = inlined_call_operand.vmem [shape: f32[1,128], index: 2, kind: input, shape index: {}]
  %s3 = inlined_call_operand.vmem [shape: f32[128,64], index: 3, kind: input, shape index: {}]
  %s4 = inlined_call_operand.vmem [shape: f32[1,64], index: 4, kind: input, shape index: {}]
  %s5 = inlined_call_operand.vmem [shape: f32[64,32], index: 5, kind: input, shape index: {}]
  %s6 = inlined_call_operand.vmem [shape: f32[1,32], index: 6, kind: input, shape index: {}]
  %s7 = inlined_call_operand.vmem [shape: f32[32,64], index: 7, kind: input, shape index: {}]
  %s8 = inlined_call_operand.vmem [shape: f32[1,64], index: 8, kind: input, shape index: {}]
  %s9 = inlined_call_operand.vmem [shape: f32[64,128], index: 9, kind: input, shape index: {}]
  %s10 = inlined_call_operand.vmem [shape: f32[1,128], index: 10, kind: input, shape index: {}]
  %s11 = inlined_call_operand.hbm [shape: f32[128,1024], index: 11, kind: input, shape index: {}]
  %s12 = inlined_call_operand.vmem [shape: f32[1,1024], index: 12, kind: input, shape index: {}]
  %s13 = inlined_call_operand.vmem [shape: f32[8,1024], index: 13, kind: output, shape index: {}]
  %s14 = sld [smem:[#allocation0]]
  $region70: #{autoencoder_forward.1} parent=0
    _
  %s16 = ssub.s32 1, %s14
  %s17 = scalar_select 0, %s16, %s14
  $region1: #{autoencoder_forward.1} parent=0
    #allocation2 [shape = 'u8[524288]{0}', space=vmem, size = 0x80000, scoped, tag = 'input window, operand 1, single buffered']
    #allocation3 [shape = 's32[1]{0}', space=sflag, size = 0x4, scoped, tag = 'scoped memory for autoencoder_forward.1']
    #allocation4 [shape = 'u8[524288]{0}', space=vmem, size = 0x80000, scoped, tag = 'input window, operand 11, single buffered']
    #allocation5 [shape = 's32[1]{0}', space=sflag, size = 0x4, scoped, tag = 'scoped memory for autoencoder_forward.1']
    %18 = vsyncpa [#allocation3], 0
    %19 = vsyncpa [#allocation5], 0
    // Predicated region
    $region2: #{autoencoder_forward.1} parent=1 // pred_check
      _
    $region3: #{autoencoder_forward.1} parent=1 // pred_check_branch
      %21 = sbr.rel (0) target = $region5
    $region4: #{autoencoder_forward.1} parent=1 // pred_region
      _
    $region5: #{autoencoder_forward.1} parent=1 // pred_fallthru
      _
    // Predicated region
    $region6: #{autoencoder_forward.1} parent=1 // pred_check
      _
    $region7: #{autoencoder_forward.1} parent=1 // pred_check_branch
      %23 = sbr.rel (0) target = $region9
    $region8: #{autoencoder_forward.1} parent=1 // pred_region
      %s25 = ssub.s32 16384, 16384
      %26 = vsyncadd [#allocation3], %s25
      %s27 = sshll.u32 [#allocation2], 4
      %s28 = int_to_ptr.vmem [resolvable:$true] %s27
      %33 = dma.hbm_to_vmem [thread:$0]  %s1, 16384, %s28, [#allocation3], 128, 128, 8
    $region9: #{autoencoder_forward.1} parent=1 // pred_fallthru
      _
    // Predicated region
    $region10: #{autoencoder_forward.1} parent=1 // pred_check
      _
    $region11: #{autoencoder_forward.1} parent=1 // pred_check_branch
      %35 = sbr.rel (0) target = $region13
    $region12: #{autoencoder_forward.1} parent=1 // pred_region
      _
    $region13: #{autoencoder_forward.1} parent=1 // pred_fallthru
      _
    // Predicated region
    $region14: #{autoencoder_forward.1} parent=1 // pred_check
      _
    $region15: #{autoencoder_forward.1} parent=1 // pred_check_branch
      %37 = sbr.rel (0) target = $region17
    $region16: #{autoencoder_forward.1} parent=1 // pred_region
      _
    $region17: #{autoencoder_forward.1} parent=1 // pred_fallthru
      _
    // Predicated region
    $region18: #{autoencoder_forward.1} parent=1 // pred_check
      _
    $region19: #{autoencoder_forward.1} parent=1 // pred_check_branch
      %39 = sbr.rel (0) target = $region21
    $region20: #{autoencoder_forward.1} parent=1 // pred_region
      _
    $region21: #{autoencoder_forward.1} parent=1 // pred_fallthru
      _
    // Predicated region
    $region22: #{autoencoder_forward.1} parent=1 // pred_check
      _
    $region23: #{autoencoder_forward.1} parent=1 // pred_check_branch
      %41 = sbr.rel (0) target = $region25
    $region24: #{autoencoder_forward.1} parent=1 // pred_region
      _
    $region25: #{autoencoder_forward.1} parent=1 // pred_fallthru
      _
    // Predicated region
    $region26: #{autoencoder_forward.1} parent=1 // pred_check
      _
    $region27: #{autoencoder_forward.1} parent=1 // pred_check_branch
      %43 = sbr.rel (0) target = $region29
    $region28: #{autoencoder_forward.1} parent=1 // pred_region
      _
    $region29: #{autoencoder_forward.1} parent=1 // pred_fallthru
      _
    // Predicated region
    $region30: #{autoencoder_forward.1} parent=1 // pred_check
      _
    $region31: #{autoencoder_forward.1} parent=1 // pred_check_branch
      %45 = sbr.rel (0) target = $region33
    $region32: #{autoencoder_forward.1} parent=1 // pred_region
      _
    $region33: #{autoencoder_forward.1} parent=1 // pred_fallthru
      _
    // Predicated region
    $region34: #{autoencoder_forward.1} parent=1 // pred_check
      _
    $region35: #{autoencoder_forward.1} parent=1 // pred_check_branch
      %47 = sbr.rel (0) target = $region37
    $region36: #{autoencoder_forward.1} parent=1 // pred_region
      _
    $region37: #{autoencoder_forward.1} parent=1 // pred_fallthru
      _
    // Predicated region
    $region38: #{autoencoder_forward.1} parent=1 // pred_check
      _
    $region39: #{autoencoder_forward.1} parent=1 // pred_check_branch
      %49 = sbr.rel (0) target = $region41
    $region40: #{autoencoder_forward.1} parent=1 // pred_region
      _
    $region41: #{autoencoder_forward.1} parent=1 // pred_fallthru
      _
    // Predicated region
    $region42: #{autoencoder_forward.1} parent=1 // pred_check
      _
    $region43: #{autoencoder_forward.1} parent=1 // pred_check_branch
      %51 = sbr.rel (0) target = $region45
    $region44: #{autoencoder_forward.1} parent=1 // pred_region
      _
    $region45: #{autoencoder_forward.1} parent=1 // pred_fallthru
      _
    // Predicated region
    $region46: #{autoencoder_forward.1} parent=1 // pred_check
      _
    $region47: #{autoencoder_forward.1} parent=1 // pred_check_branch
      %53 = sbr.rel (0) target = $region49
    $region48: #{autoencoder_forward.1} parent=1 // pred_region
      %s55 = ssub.s32 16384, 16384
      %56 = vsyncadd [#allocation5], %s55
      %s57 = sshll.u32 [#allocation4], 4
      %s58 = int_to_ptr.vmem [resolvable:$true] %s57
      %63 = dma.hbm_to_vmem [thread:$0]  %s11, 16384, %s58, [#allocation5], 1024, 1024, 64
    $region49: #{autoencoder_forward.1} parent=1 // pred_fallthru
      _
    // Predicated region
    $region50: #{autoencoder_forward.1} parent=1 // pred_check
      _
    $region51: #{autoencoder_forward.1} parent=1 // pred_check_branch
      %65 = sbr.rel (0) target = $region53
    $region52: #{autoencoder_forward.1} parent=1 // pred_region
      _
    $region53: #{autoencoder_forward.1} parent=1 // pred_fallthru
      _
    // Predicated region
    $region54: #{autoencoder_forward.1} parent=1 // pred_check
      _
    $region55: #{autoencoder_forward.1} parent=1 // pred_check_branch
      %67 = sbr.rel (0) target = $region57
    $region56: #{autoencoder_forward.1} parent=1 // pred_region
      %68 = dma.done [#allocation3], 16384
    $region57: #{autoencoder_forward.1} parent=1 // pred_fallthru
      _
    // Predicated region
    $region58: #{autoencoder_forward.1} parent=1 // pred_check
      _
    $region59: #{autoencoder_forward.1} parent=1 // pred_check_branch
      %70 = sbr.rel (0) target = $region61
    $region60: #{autoencoder_forward.1} parent=1 // pred_region
      %71 = dma.done [#allocation5], 16384
    $region61: #{autoencoder_forward.1} parent=1 // pred_fallthru
      _
    %v72 = vld [vmem:[%s0] sm:$0xff]
    %v73 = vld [vmem:[%s0 + $0x8] sm:$0xff]
    %v74 = vld [vmem:[%s0 + $0x10] sm:$0xff]
    %v75 = vld [vmem:[%s0 + $0x18] sm:$0xff]
    %v76 = vld [vmem:[%s0 + $0x20] sm:$0xff]
    %v77 = vld [vmem:[%s0 + $0x28] sm:$0xff]
    %v78 = vld [vmem:[%s0 + $0x30] sm:$0xff]
    %v79 = vld [vmem:[%s0 + $0x38] sm:$0xff]
    %v80 = vld [vmem:[#allocation2] sm:$0xff]
    %v81 = vld [vmem:[#allocation2 + $0x8] sm:$0xff]
    %v82 = vld [vmem:[#allocation2 + $0x10] sm:$0xff]
    %v83 = vld [vmem:[#allocation2 + $0x18] sm:$0xff]
    %v84 = vld [vmem:[#allocation2 + $0x20] sm:$0xff]
    %v85 = vld [vmem:[#allocation2 + $0x28] sm:$0xff]
    %v86 = vld [vmem:[#allocation2 + $0x30] sm:$0xff]
    %v87 = vld [vmem:[#allocation2 + $0x38] sm:$0xff]
    %v88 = vld [vmem:[#allocation2 + $0x40] sm:$0xff]
    %v89 = vld [vmem:[#allocation2 + $0x48] sm:$0xff]
    %v90 = vld [vmem:[#allocation2 + $0x50] sm:$0xff]
    %v91 = vld [vmem:[#allocation2 + $0x58] sm:$0xff]
    %v92 = vld [vmem:[#allocation2 + $0x60] sm:$0xff]
    %v93 = vld [vmem:[#allocation2 + $0x68] sm:$0xff]
    %v94 = vld [vmem:[#allocation2 + $0x70] sm:$0xff]
    %v95 = vld [vmem:[#allocation2 + $0x78] sm:$0xff]
    %v96 = vld [vmem:[#allocation2 + $0x80] sm:$0xff]
    %v97 = vld [vmem:[#allocation2 + $0x88] sm:$0xff]
    %v98 = vld [vmem:[#allocation2 + $0x90] sm:$0xff]
    %v99 = vld [vmem:[#allocation2 + $0x98] sm:$0xff]
    %v100 = vld [vmem:[#allocation2 + $0xa0] sm:$0xff]
    %v101 = vld [vmem:[#allocation2 + $0xa8] sm:$0xff]
    %v102 = vld [vmem:[#allocation2 + $0xb0] sm:$0xff]
    %v103 = vld [vmem:[#allocation2 + $0xb8] sm:$0xff]
    %v104 = vld [vmem:[#allocation2 + $0xc0] sm:$0xff]
    %v105 = vld [vmem:[#allocation2 + $0xc8] sm:$0xff]
    %v106 = vld [vmem:[#allocation2 + $0xd0] sm:$0xff]
    %v107 = vld [vmem:[#allocation2 + $0xd8] sm:$0xff]
    %v108 = vld [vmem:[#allocation2 + $0xe0] sm:$0xff]
    %v109 = vld [vmem:[#allocation2 + $0xe8] sm:$0xff]
    %v110 = vld [vmem:[#allocation2 + $0xf0] sm:$0xff]
    %v111 = vld [vmem:[#allocation2 + $0xf8] sm:$0xff]
    %v112 = vld [vmem:[#allocation2 + $0x100] sm:$0xff]
    %v113 = vld [vmem:[#allocation2 + $0x108] sm:$0xff]
    %v114 = vld [vmem:[#allocation2 + $0x110] sm:$0xff]
    %v115 = vld [vmem:[#allocation2 + $0x118] sm:$0xff]
    %v116 = vld [vmem:[#allocation2 + $0x120] sm:$0xff]
    %v117 = vld [vmem:[#allocation2 + $0x128] sm:$0xff]
    %v118 = vld [vmem:[#allocation2 + $0x130] sm:$0xff]
    %v119 = vld [vmem:[#allocation2 + $0x138] sm:$0xff]
    %v120 = vld [vmem:[#allocation2 + $0x140] sm:$0xff]
    %v121 = vld [vmem:[#allocation2 + $0x148] sm:$0xff]
    %v122 = vld [vmem:[#allocation2 + $0x150] sm:$0xff]
    %v123 = vld [vmem:[#allocation2 + $0x158] sm:$0xff]
    %v124 = vld [vmem:[#allocation2 + $0x160] sm:$0xff]
    %v125 = vld [vmem:[#allocation2 + $0x168] sm:$0xff]
    %v126 = vld [vmem:[#allocation2 + $0x170] sm:$0xff]
    %v127 = vld [vmem:[#allocation2 + $0x178] sm:$0xff]
    %v128 = vld [vmem:[#allocation2 + $0x180] sm:$0xff]
    %v129 = vld [vmem:[#allocation2 + $0x188] sm:$0xff]
    %v130 = vld [vmem:[#allocation2 + $0x190] sm:$0xff]
    %v131 = vld [vmem:[#allocation2 + $0x198] sm:$0xff]
    %v132 = vld [vmem:[#allocation2 + $0x1a0] sm:$0xff]
    %v133 = vld [vmem:[#allocation2 + $0x1a8] sm:$0xff]
    %v134 = vld [vmem:[#allocation2 + $0x1b0] sm:$0xff]
    %v135 = vld [vmem:[#allocation2 + $0x1b8] sm:$0xff]
    %v136 = vld [vmem:[#allocation2 + $0x1c0] sm:$0xff]
    %v137 = vld [vmem:[#allocation2 + $0x1c8] sm:$0xff]
    %v138 = vld [vmem:[#allocation2 + $0x1d0] sm:$0xff]
    %v139 = vld [vmem:[#allocation2 + $0x1d8] sm:$0xff]
    %v140 = vld [vmem:[#allocation2 + $0x1e0] sm:$0xff]
    %v141 = vld [vmem:[#allocation2 + $0x1e8] sm:$0xff]
    %v142 = vld [vmem:[#allocation2 + $0x1f0] sm:$0xff]
    %v143 = vld [vmem:[#allocation2 + $0x1f8] sm:$0xff]
    %v144 = vld [vmem:[#allocation2 + $0x200] sm:$0xff]
    %v145 = vld [vmem:[#allocation2 + $0x208] sm:$0xff]
    %v146 = vld [vmem:[#allocation2 + $0x210] sm:$0xff]
    %v147 = vld [vmem:[#allocation2 + $0x218] sm:$0xff]
    %v148 = vld [vmem:[#allocation2 + $0x220] sm:$0xff]
    %v149 = vld [vmem:[#allocation2 + $0x228] sm:$0xff]
    %v150 = vld [vmem:[#allocation2 + $0x230] sm:$0xff]
    %v151 = vld [vmem:[#allocation2 + $0x238] sm:$0xff]
    %v152 = vld [vmem:[#allocation2 + $0x240] sm:$0xff]
    %v153 = vld [vmem:[#allocation2 + $0x248] sm:$0xff]
    %v154 = vld [vmem:[#allocation2 + $0x250] sm:$0xff]
    %v155 = vld [vmem:[#allocation2 + $0x258] sm:$0xff]
    %v156 = vld [vmem:[#allocation2 + $0x260] sm:$0xff]
    %v157 = vld [vmem:[#allocation2 + $0x268] sm:$0xff]
    %v158 = vld [vmem:[#allocation2 + $0x270] sm:$0xff]
    %v159 = vld [vmem:[#allocation2 + $0x278] sm:$0xff]
    %v160 = vld [vmem:[#allocation2 + $0x280] sm:$0xff]
    %v161 = vld [vmem:[#allocation2 + $0x288] sm:$0xff]
    %v162 = vld [vmem:[#allocation2 + $0x290] sm:$0xff]
    %v163 = vld [vmem:[#allocation2 + $0x298] sm:$0xff]
    %v164 = vld [vmem:[#allocation2 + $0x2a0] sm:$0xff]
    %v165 = vld [vmem:[#allocation2 + $0x2a8] sm:$0xff]
    %v166 = vld [vmem:[#allocation2 + $0x2b0] sm:$0xff]
    %v167 = vld [vmem:[#allocation2 + $0x2b8] sm:$0xff]
    %v168 = vld [vmem:[#allocation2 + $0x2c0] sm:$0xff]
    %v169 = vld [vmem:[#allocation2 + $0x2c8] sm:$0xff]
    %v170 = vld [vmem:[#allocation2 + $0x2d0] sm:$0xff]
    %v171 = vld [vmem:[#allocation2 + $0x2d8] sm:$0xff]
    %v172 = vld [vmem:[#allocation2 + $0x2e0] sm:$0xff]
    %v173 = vld [vmem:[#allocation2 + $0x2e8] sm:$0xff]
    %v174 = vld [vmem:[#allocation2 + $0x2f0] sm:$0xff]
    %v175 = vld [vmem:[#allocation2 + $0x2f8] sm:$0xff]
    %v176 = vld [vmem:[#allocation2 + $0x300] sm:$0xff]
    %v177 = vld [vmem:[#allocation2 + $0x308] sm:$0xff]
    %v178 = vld [vmem:[#allocation2 + $0x310] sm:$0xff]
    %v179 = vld [vmem:[#allocation2 + $0x318] sm:$0xff]
    %v180 = vld [vmem:[#allocation2 + $0x320] sm:$0xff]
    %v181 = vld [vmem:[#allocation2 + $0x328] sm:$0xff]
    %v182 = vld [vmem:[#allocation2 + $0x330] sm:$0xff]
    %v183 = vld [vmem:[#allocation2 + $0x338] sm:$0xff]
    %v184 = vld [vmem:[#allocation2 + $0x340] sm:$0xff]
    %v185 = vld [vmem:[#allocation2 + $0x348] sm:$0xff]
    %v186 = vld [vmem:[#allocation2 + $0x350] sm:$0xff]
    %v187 = vld [vmem:[#allocation2 + $0x358] sm:$0xff]
    %v188 = vld [vmem:[#allocation2 + $0x360] sm:$0xff]
    %v189 = vld [vmem:[#allocation2 + $0x368] sm:$0xff]
    %v190 = vld [vmem:[#allocation2 + $0x370] sm:$0xff]
    %v191 = vld [vmem:[#allocation2 + $0x378] sm:$0xff]
    %v192 = vld [vmem:[#allocation2 + $0x380] sm:$0xff]
    %v193 = vld [vmem:[#allocation2 + $0x388] sm:$0xff]
    %v194 = vld [vmem:[#allocation2 + $0x390] sm:$0xff]
    %v195 = vld [vmem:[#allocation2 + $0x398] sm:$0xff]
    %v196 = vld [vmem:[#allocation2 + $0x3a0] sm:$0xff]
    %v197 = vld [vmem:[#allocation2 + $0x3a8] sm:$0xff]
    %v198 = vld [vmem:[#allocation2 + $0x3b0] sm:$0xff]
    %v199 = vld [vmem:[#allocation2 + $0x3b8] sm:$0xff]
    %v200 = vld [vmem:[#allocation2 + $0x3c0] sm:$0xff]
    %v201 = vld [vmem:[#allocation2 + $0x3c8] sm:$0xff]
    %v202 = vld [vmem:[#allocation2 + $0x3d0] sm:$0xff]
    %v203 = vld [vmem:[#allocation2 + $0x3d8] sm:$0xff]
    %v204 = vld [vmem:[#allocation2 + $0x3e0] sm:$0xff]
    %v205 = vld [vmem:[#allocation2 + $0x3e8] sm:$0xff]
    %v206 = vld [vmem:[#allocation2 + $0x3f0] sm:$0xff]
    %v207 = vld [vmem:[#allocation2 + $0x3f8] sm:$0xff]
    %v208 = vld [vmem:[%s2] sm:$0x1]
    %v210 = vlaneseq
    %v211 = vshrl.u32 %v210, 7
    %v212 = vsub.s32 0, %v211
    %v213 = vrot.slane %v208, %v212
    %215 = vmatprep.subr.mxu0 0.0
    %216 = vmatpush1.msra.mxu0 %v80
    %217 = vmatprep.subr.mxu0 0.0
    %218 = vmatpush1.msra.mxu0 %v81
    %219 = vmatprep.subr.mxu0 0.0
    %220 = vmatpush1.msra.mxu0 %v82
    %221 = vmatprep.subr.mxu0 0.0
    %222 = vmatpush1.msra.mxu0 %v83
    %223 = vmatprep.subr.mxu0 0.0
    %224 = vmatpush1.msra.mxu0 %v84
    %225 = vmatprep.subr.mxu0 0.0
    %226 = vmatpush1.msra.mxu0 %v85
    %227 = vmatprep.subr.mxu0 0.0
    %228 = vmatpush1.msra.mxu0 %v86
    %229 = vmatprep.subr.mxu0 0.0
    %230 = vmatpush1.msra.mxu0 %v87
    %231 = vmatprep.subr.mxu0 0.0
    %232 = vmatpush1.msra.mxu0 %v88
    %233 = vmatprep.subr.mxu0 0.0
    %234 = vmatpush1.msra.mxu0 %v89
    %235 = vmatprep.subr.mxu0 0.0
    %236 = vmatpush1.msra.mxu0 %v90
    %237 = vmatprep.subr.mxu0 0.0
    %238 = vmatpush1.msra.mxu0 %v91
    %239 = vmatprep.subr.mxu0 0.0
    %240 = vmatpush1.msra.mxu0 %v92
    %241 = vmatprep.subr.mxu0 0.0
    %242 = vmatpush1.msra.mxu0 %v93
    %243 = vmatprep.subr.mxu0 0.0
    %244 = vmatpush1.msra.mxu0 %v94
    %245 = vmatprep.subr.mxu0 0.0
    %246 = vmatpush1.msra.mxu0 %v95
    %247 = vmatprep.subr.mxu0 0.0
    %248 = vmatpush1.msra.mxu0 %v96
    %249 = vmatprep.subr.mxu0 0.0
    %250 = vmatpush1.msra.mxu0 %v97
    %251 = vmatprep.subr.mxu0 0.0
    %252 = vmatpush1.msra.mxu0 %v98
    %253 = vmatprep.subr.mxu0 0.0
    %254 = vmatpush1.msra.mxu0 %v99
    %255 = vmatprep.subr.mxu0 0.0
    %256 = vmatpush1.msra.mxu0 %v100
    %257 = vmatprep.subr.mxu0 0.0
    %258 = vmatpush1.msra.mxu0 %v101
    %259 = vmatprep.subr.mxu0 0.0
    %260 = vmatpush1.msra.mxu0 %v102
    %261 = vmatprep.subr.mxu0 0.0
    %262 = vmatpush1.msra.mxu0 %v103
    %263 = vmatprep.subr.mxu0 0.0
    %264 = vmatpush1.msra.mxu0 %v104
    %265 = vmatprep.subr.mxu0 0.0
    %266 = vmatpush1.msra.mxu0 %v105
    %267 = vmatprep.subr.mxu0 0.0
    %268 = vmatpush1.msra.mxu0 %v106
    %269 = vmatprep.subr.mxu0 0.0
    %270 = vmatpush1.msra.mxu0 %v107
    %271 = vmatprep.subr.mxu0 0.0
    %272 = vmatpush1.msra.mxu0 %v108
    %273 = vmatprep.subr.mxu0 0.0
    %274 = vmatpush1.msra.mxu0 %v109
    %275 = vmatprep.subr.mxu0 0.0
    %276 = vmatpush1.msra.mxu0 %v110
    %277 = vmatprep.subr.mxu0 0.0
    %278 = vmatpush1.msra.mxu0 %v111
    %279 = vmatprep.mubr.f32.mxu0 %v73
    %280 = vmatmul.mubr.f32.gmra.mrb[0].mxu0 %v72
    %v281 = vpop.f32.mrb[0].mxu0
    %v282 = vadd.f32 %v213, %v281
    %v283 = vpop.f32.mrb[0].mxu0
    %284 = vdwg.mxu0
    %285 = vmatprep.subr.mxu0 0.0
    %286 = vmatpush1.msra.mxu0 %v112
    %287 = vmatprep.subr.mxu0 0.0
    %288 = vmatpush1.msra.mxu0 %v113
    %289 = vmatprep.subr.mxu0 0.0
    %290 = vmatpush1.msra.mxu0 %v114
    %291 = vmatprep.subr.mxu0 0.0
    %292 = vmatpush1.msra.mxu0 %v115
    %293 = vmatprep.subr.mxu0 0.0
    %294 = vmatpush1.msra.mxu0 %v116
    %295 = vmatprep.subr.mxu0 0.0
    %296 = vmatpush1.msra.mxu0 %v117
    %297 = vmatprep.subr.mxu0 0.0
    %298 = vmatpush1.msra.mxu0 %v118
    %299 = vmatprep.subr.mxu0 0.0
    %300 = vmatpush1.msra.mxu0 %v119
    %301 = vmatprep.subr.mxu0 0.0
    %302 = vmatpush1.msra.mxu0 %v120
    %303 = vmatprep.subr.mxu0 0.0
    %304 = vmatpush1.msra.mxu0 %v121
    %305 = vmatprep.subr.mxu0 0.0
    %306 = vmatpush1.msra.mxu0 %v122
    %307 = vmatprep.subr.mxu0 0.0
    %308 = vmatpush1.msra.mxu0 %v123
    %309 = vmatprep.subr.mxu0 0.0
    %310 = vmatpush1.msra.mxu0 %v124
    %311 = vmatprep.subr.mxu0 0.0
    %312 = vmatpush1.msra.mxu0 %v125
    %313 = vmatprep.subr.mxu0 0.0
    %314 = vmatpush1.msra.mxu0 %v126
    %315 = vmatprep.subr.mxu0 0.0
    %316 = vmatpush1.msra.mxu0 %v127
    %317 = vmatprep.subr.mxu0 0.0
    %318 = vmatpush1.msra.mxu0 %v128
    %319 = vmatprep.subr.mxu0 0.0
    %320 = vmatpush1.msra.mxu0 %v129
    %321 = vmatprep.subr.mxu0 0.0
    %322 = vmatpush1.msra.mxu0 %v130
    %323 = vmatprep.subr.mxu0 0.0
    %324 = vmatpush1.msra.mxu0 %v131
    %325 = vmatprep.subr.mxu0 0.0
    %326 = vmatpush1.msra.mxu0 %v132
    %327 = vmatprep.subr.mxu0 0.0
    %328 = vmatpush1.msra.mxu0 %v133
    %329 = vmatprep.subr.mxu0 0.0
    %330 = vmatpush1.msra.mxu0 %v134
    %331 = vmatprep.subr.mxu0 0.0
    %332 = vmatpush1.msra.mxu0 %v135
    %333 = vmatprep.subr.mxu0 0.0
    %334 = vmatpush1.msra.mxu0 %v136
    %335 = vmatprep.subr.mxu0 0.0
    %336 = vmatpush1.msra.mxu0 %v137
    %337 = vmatprep.subr.mxu0 0.0
    %338 = vmatpush1.msra.mxu0 %v138
    %339 = vmatprep.subr.mxu0 0.0
    %340 = vmatpush1.msra.mxu0 %v139
    %341 = vmatprep.subr.mxu0 0.0
    %342 = vmatpush1.msra.mxu0 %v140
    %343 = vmatprep.subr.mxu0 0.0
    %344 = vmatpush1.msra.mxu0 %v141
    %345 = vmatprep.subr.mxu0 0.0
    %346 = vmatpush1.msra.mxu0 %v142
    %347 = vmatprep.subr.mxu0 0.0
    %348 = vmatpush1.msra.mxu0 %v143
    %349 = vmatprep.mubr.f32.mxu0 %v75
    %350 = vmatmul.mubr.f32.gmra.mrb[0].mxu0 %v74
    %v351 = vpop.f32.mrb[0].mxu0
    %v352 = vadd.f32 %v282, %v351
    %v353 = vpop.f32.mrb[0].mxu0
    %354 = vdwg.mxu0
    %355 = vmatprep.subr.mxu0 0.0
    %356 = vmatpush1.msra.mxu0 %v144
    %357 = vmatprep.subr.mxu0 0.0
    %358 = vmatpush1.msra.mxu0 %v145
    %359 = vmatprep.subr.mxu0 0.0
    %360 = vmatpush1.msra.mxu0 %v146
    %361 = vmatprep.subr.mxu0 0.0
    %362 = vmatpush1.msra.mxu0 %v147
    %363 = vmatprep.subr.mxu0 0.0
    %364 = vmatpush1.msra.mxu0 %v148
    %365 = vmatprep.subr.mxu0 0.0
    %366 = vmatpush1.msra.mxu0 %v149
    %367 = vmatprep.subr.mxu0 0.0
    %368 = vmatpush1.msra.mxu0 %v150
    %369 = vmatprep.subr.mxu0 0.0
    %370 = vmatpush1.msra.mxu0 %v151
    %371 = vmatprep.subr.mxu0 0.0
    %372 = vmatpush1.msra.mxu0 %v152
    %373 = vmatprep.subr.mxu0 0.0
    %374 = vmatpush1.msra.mxu0 %v153
    %375 = vmatprep.subr.mxu0 0.0
    %376 = vmatpush1.msra.mxu0 %v154
    %377 = vmatprep.subr.mxu0 0.0
    %378 = vmatpush1.msra.mxu0 %v155
    %379 = vmatprep.subr.mxu0 0.0
    %380 = vmatpush1.msra.mxu0 %v156
    %381 = vmatprep.subr.mxu0 0.0
    %382 = vmatpush1.msra.mxu0 %v157
    %383 = vmatprep.subr.mxu0 0.0
    %384 = vmatpush1.msra.mxu0 %v158
    %385 = vmatprep.subr.mxu0 0.0
    %386 = vmatpush1.msra.mxu0 %v159
    %387 = vmatprep.subr.mxu0 0.0
    %388 = vmatpush1.msra.mxu0 %v160
    %389 = vmatprep.subr.mxu0 0.0
    %390 = vmatpush1.msra.mxu0 %v161
    %391 = vmatprep.subr.mxu0 0.0
    %392 = vmatpush1.msra.mxu0 %v162
    %393 = vmatprep.subr.mxu0 0.0
    %394 = vmatpush1.msra.mxu0 %v163
    %395 = vmatprep.subr.mxu0 0.0
    %396 = vmatpush1.msra.mxu0 %v164
    %397 = vmatprep.subr.mxu0 0.0
    %398 = vmatpush1.msra.mxu0 %v165
    %399 = vmatprep.subr.mxu0 0.0
    %400 = vmatpush1.msra.mxu0 %v166
    %401 = vmatprep.subr.mxu0 0.0
    %402 = vmatpush1.msra.mxu0 %v167
    %403 = vmatprep.subr.mxu0 0.0
    %404 = vmatpush1.msra.mxu0 %v168
    %405 = vmatprep.subr.mxu0 0.0
    %406 = vmatpush1.msra.mxu0 %v169
    %407 = vmatprep.subr.mxu0 0.0
    %408 = vmatpush1.msra.mxu0 %v170
    %409 = vmatprep.subr.mxu0 0.0
    %410 = vmatpush1.msra.mxu0 %v171
    %411 = vmatprep.subr.mxu0 0.0
    %412 = vmatpush1.msra.mxu0 %v172
    %413 = vmatprep.subr.mxu0 0.0
    %414 = vmatpush1.msra.mxu0 %v173
    %415 = vmatprep.subr.mxu0 0.0
    %416 = vmatpush1.msra.mxu0 %v174
    %417 = vmatprep.subr.mxu0 0.0
    %418 = vmatpush1.msra.mxu0 %v175
    %419 = vmatprep.mubr.f32.mxu0 %v77
    %420 = vmatmul.mubr.f32.gmra.mrb[0].mxu0 %v76
    %v421 = vpop.f32.mrb[0].mxu0
    %v422 = vadd.f32 %v352, %v421
    %v423 = vpop.f32.mrb[0].mxu0
    %424 = vdwg.mxu0
    %425 = vmatprep.subr.mxu0 0.0
    %426 = vmatpush1.msra.mxu0 %v176
    %427 = vmatprep.subr.mxu0 0.0
    %428 = vmatpush1.msra.mxu0 %v177
    %429 = vmatprep.subr.mxu0 0.0
    %430 = vmatpush1.msra.mxu0 %v178
    %431 = vmatprep.subr.mxu0 0.0
    %432 = vmatpush1.msra.mxu0 %v179
    %433 = vmatprep.subr.mxu0 0.0
    %434 = vmatpush1.msra.mxu0 %v180
    %435 = vmatprep.subr.mxu0 0.0
    %436 = vmatpush1.msra.mxu0 %v181
    %437 = vmatprep.subr.mxu0 0.0
    %438 = vmatpush1.msra.mxu0 %v182
    %439 = vmatprep.subr.mxu0 0.0
    %440 = vmatpush1.msra.mxu0 %v183
    %441 = vmatprep.subr.mxu0 0.0
    %442 = vmatpush1.msra.mxu0 %v184
    %443 = vmatprep.subr.mxu0 0.0
    %444 = vmatpush1.msra.mxu0 %v185
    %445 = vmatprep.subr.mxu0 0.0
    %446 = vmatpush1.msra.mxu0 %v186
    %447 = vmatprep.subr.mxu0 0.0
    %448 = vmatpush1.msra.mxu0 %v187
    %449 = vmatprep.subr.mxu0 0.0
    %450 = vmatpush1.msra.mxu0 %v188
    %451 = vmatprep.subr.mxu0 0.0
    %452 = vmatpush1.msra.mxu0 %v189
    %453 = vmatprep.subr.mxu0 0.0
    %454 = vmatpush1.msra.mxu0 %v190
    %455 = vmatprep.subr.mxu0 0.0
    %456 = vmatpush1.msra.mxu0 %v191
    %457 = vmatprep.subr.mxu0 0.0
    %458 = vmatpush1.msra.mxu0 %v192
    %459 = vmatprep.subr.mxu0 0.0
    %460 = vmatpush1.msra.mxu0 %v193
    %461 = vmatprep.subr.mxu0 0.0
    %462 = vmatpush1.msra.mxu0 %v194
    %463 = vmatprep.subr.mxu0 0.0
    %464 = vmatpush1.msra.mxu0 %v195
    %465 = vmatprep.subr.mxu0 0.0
    %466 = vmatpush1.msra.mxu0 %v196
    %467 = vmatprep.subr.mxu0 0.0
    %468 = vmatpush1.msra.mxu0 %v197
    %469 = vmatprep.subr.mxu0 0.0
    %470 = vmatpush1.msra.mxu0 %v198
    %471 = vmatprep.subr.mxu0 0.0
    %472 = vmatpush1.msra.mxu0 %v199
    %473 = vmatprep.subr.mxu0 0.0
    %474 = vmatpush1.msra.mxu0 %v200
    %475 = vmatprep.subr.mxu0 0.0
    %476 = vmatpush1.msra.mxu0 %v201
    %477 = vmatprep.subr.mxu0 0.0
    %478 = vmatpush1.msra.mxu0 %v202
    %479 = vmatprep.subr.mxu0 0.0
    %480 = vmatpush1.msra.mxu0 %v203
    %481 = vmatprep.subr.mxu0 0.0
    %482 = vmatpush1.msra.mxu0 %v204
    %483 = vmatprep.subr.mxu0 0.0
    %484 = vmatpush1.msra.mxu0 %v205
    %485 = vmatprep.subr.mxu0 0.0
    %486 = vmatpush1.msra.mxu0 %v206
    %487 = vmatprep.subr.mxu0 0.0
    %488 = vmatpush1.msra.mxu0 %v207
    %489 = vmatprep.mubr.f32.mxu0 %v79
    %490 = vmatmul.mubr.f32.gmra.mrb[0].mxu0 %v78
    %v491 = vpop.f32.mrb[0].mxu0
    %v492 = vadd.f32 %v422, %v491
    %v493 = vpop.f32.mrb[0].mxu0
    %494 = vdwg.mxu0
    %v495 = vmax.f32 %v492, 0.0
    %v496 = vld [vmem:[%s3] sm:$0xff]
    %v497 = vld [vmem:[%s3 + $0x8] sm:$0xff]
    %v498 = vld [vmem:[%s3 + $0x10] sm:$0xff]
    %v499 = vld [vmem:[%s3 + $0x18] sm:$0xff]
    %v500 = vld [vmem:[%s3 + $0x20] sm:$0xff]
    %v501 = vld [vmem:[%s3 + $0x28] sm:$0xff]
    %v502 = vld [vmem:[%s3 + $0x30] sm:$0xff]
    %v503 = vld [vmem:[%s3 + $0x38] sm:$0xff]
    %v504 = vld [vmem:[%s3 + $0x40] sm:$0xff]
    %v505 = vld [vmem:[%s3 + $0x48] sm:$0xff]
    %v506 = vld [vmem:[%s3 + $0x50] sm:$0xff]
    %v507 = vld [vmem:[%s3 + $0x58] sm:$0xff]
    %v508 = vld [vmem:[%s3 + $0x60] sm:$0xff]
    %v509 = vld [vmem:[%s3 + $0x68] sm:$0xff]
    %v510 = vld [vmem:[%s3 + $0x70] sm:$0xff]
    %v511 = vld [vmem:[%s3 + $0x78] sm:$0xff]
    %v512 = vld [vmem:[%s4] sm:$0x1]
    %v514 = vlaneseq
    %v515 = vshrl.u32 %v514, 7
    %v516 = vsub.s32 0, %v515
    %v517 = vrot.slane %v512, %v516
    %519 = vmatprep.subr.mxu0 0.0
    %520 = vmatpush1.msra.mxu0 %v496
    %521 = vmatprep.subr.mxu0 0.0
    %522 = vmatpush1.msra.mxu0 %v497
    %523 = vmatprep.subr.mxu0 0.0
    %524 = vmatpush1.msra.mxu0 %v498
    %525 = vmatprep.subr.mxu0 0.0
    %526 = vmatpush1.msra.mxu0 %v499
    %527 = vmatprep.subr.mxu0 0.0
    %528 = vmatpush1.msra.mxu0 %v500
    %529 = vmatprep.subr.mxu0 0.0
    %530 = vmatpush1.msra.mxu0 %v501
    %531 = vmatprep.subr.mxu0 0.0
    %532 = vmatpush1.msra.mxu0 %v502
    %533 = vmatprep.subr.mxu0 0.0
    %534 = vmatpush1.msra.mxu0 %v503
    %535 = vmatprep.subr.mxu0 0.0
    %536 = vmatpush1.msra.mxu0 %v504
    %537 = vmatprep.subr.mxu0 0.0
    %538 = vmatpush1.msra.mxu0 %v505
    %539 = vmatprep.subr.mxu0 0.0
    %540 = vmatpush1.msra.mxu0 %v506
    %541 = vmatprep.subr.mxu0 0.0
    %542 = vmatpush1.msra.mxu0 %v507
    %543 = vmatprep.subr.mxu0 0.0
    %544 = vmatpush1.msra.mxu0 %v508
    %545 = vmatprep.subr.mxu0 0.0
    %546 = vmatpush1.msra.mxu0 %v509
    %547 = vmatprep.subr.mxu0 0.0
    %548 = vmatpush1.msra.mxu0 %v510
    %549 = vmatprep.subr.mxu0 0.0
    %550 = vmatpush1.msra.mxu0 %v511
    %551 = vmatprep.subr.mxu0 0.0
    %552 = vmatpush1.msra.mxu0 0.0
    %553 = vmatprep.subr.mxu0 0.0
    %554 = vmatpush1.msra.mxu0 0.0
    %555 = vmatprep.subr.mxu0 0.0
    %556 = vmatpush1.msra.mxu0 0.0
    %557 = vmatprep.subr.mxu0 0.0
    %558 = vmatpush1.msra.mxu0 0.0
    %559 = vmatprep.subr.mxu0 0.0
    %560 = vmatpush1.msra.mxu0 0.0
    %561 = vmatprep.subr.mxu0 0.0
    %562 = vmatpush1.msra.mxu0 0.0
    %563 = vmatprep.subr.mxu0 0.0
    %564 = vmatpush1.msra.mxu0 0.0
    %565 = vmatprep.subr.mxu0 0.0
    %566 = vmatpush1.msra.mxu0 0.0
    %567 = vmatprep.subr.mxu0 0.0
    %568 = vmatpush1.msra.mxu0 0.0
    %569 = vmatprep.subr.mxu0 0.0
    %570 = vmatpush1.msra.mxu0 0.0
    %571 = vmatprep.subr.mxu0 0.0
    %572 = vmatpush1.msra.mxu0 0.0
    %573 = vmatprep.subr.mxu0 0.0
    %574 = vmatpush1.msra.mxu0 0.0
    %575 = vmatprep.subr.mxu0 0.0
    %576 = vmatpush1.msra.mxu0 0.0
    %577 = vmatprep.subr.mxu0 0.0
    %578 = vmatpush1.msra.mxu0 0.0
    %579 = vmatprep.subr.mxu0 0.0
    %580 = vmatpush1.msra.mxu0 0.0
    %581 = vmatprep.subr.mxu0 0.0
    %582 = vmatpush1.msra.mxu0 0.0
    %583 = vmatprep.mubr.f32.mxu0 0.0
    %584 = vmatmul.mubr.f32.gmra.mrb[0].mxu0 %v495
    %v585 = vpop.f32.mrb[0].mxu0
    %v586 = vadd.f32 %v517, %v585
    %v587 = vpop.f32.mrb[0].mxu0
    %588 = vdwg.mxu0
    %v589 = vmax.f32 %v586, 0.0
    %v590 = vld [vmem:[%s5] sm:$0xff]
    %v591 = vld [vmem:[%s5 + $0x8] sm:$0xff]
    %v592 = vld [vmem:[%s5 + $0x10] sm:$0xff]
    %v593 = vld [vmem:[%s5 + $0x18] sm:$0xff]
    %v594 = vld [vmem:[%s5 + $0x20] sm:$0xff]
    %v595 = vld [vmem:[%s5 + $0x28] sm:$0xff]
    %v596 = vld [vmem:[%s5 + $0x30] sm:$0xff]
    %v597 = vld [vmem:[%s5 + $0x38] sm:$0xff]
    %v598 = vld [vmem:[%s6] sm:$0x1]
    %v600 = vlaneseq
    %v601 = vshrl.u32 %v600, 7
    %v602 = vsub.s32 0, %v601
    %v603 = vrot.slane %v598, %v602
    %vm605 = vcmask 523264
    %v607 = vsel %vm605, %v589, 0
    %609 = vmatprep.subr.mxu0 0.0
    %610 = vmatpush1.msra.mxu0 %v590
    %611 = vmatprep.subr.mxu0 0.0
    %612 = vmatpush1.msra.mxu0 %v591
    %613 = vmatprep.subr.mxu0 0.0
    %614 = vmatpush1.msra.mxu0 %v592
    %615 = vmatprep.subr.mxu0 0.0
    %616 = vmatpush1.msra.mxu0 %v593
    %617 = vmatprep.subr.mxu0 0.0
    %618 = vmatpush1.msra.mxu0 %v594
    %619 = vmatprep.subr.mxu0 0.0
    %620 = vmatpush1.msra.mxu0 %v595
    %621 = vmatprep.subr.mxu0 0.0
    %622 = vmatpush1.msra.mxu0 %v596
    %623 = vmatprep.subr.mxu0 0.0
    %624 = vmatpush1.msra.mxu0 %v597
    %625 = vmatprep.subr.mxu0 0.0
    %626 = vmatpush1.msra.mxu0 0.0
    %627 = vmatprep.subr.mxu0 0.0
    %628 = vmatpush1.msra.mxu0 0.0
    %629 = vmatprep.subr.mxu0 0.0
    %630 = vmatpush1.msra.mxu0 0.0
    %631 = vmatprep.subr.mxu0 0.0
    %632 = vmatpush1.msra.mxu0 0.0
    %633 = vmatprep.subr.mxu0 0.0
    %634 = vmatpush1.msra.mxu0 0.0
    %635 = vmatprep.subr.mxu0 0.0
    %636 = vmatpush1.msra.mxu0 0.0
    %637 = vmatprep.subr.mxu0 0.0
    %638 = vmatpush1.msra.mxu0 0.0
    %639 = vmatprep.subr.mxu0 0.0
    %640 = vmatpush1.msra.mxu0 0.0
    %641 = vmatprep.subr.mxu0 0.0
    %642 = vmatpush1.msra.mxu0 0.0
    %643 = vmatprep.subr.mxu0 0.0
    %644 = vmatpush1.msra.mxu0 0.0
    %645 = vmatprep.subr.mxu0 0.0
    %646 = vmatpush1.msra.mxu0 0.0
    %647 = vmatprep.subr.mxu0 0.0
    %648 = vmatpush1.msra.mxu0 0.0
    %649 = vmatprep.subr.mxu0 0.0
    %650 = vmatpush1.msra.mxu0 0.0
    %651 = vmatprep.subr.mxu0 0.0
    %652 = vmatpush1.msra.mxu0 0.0
    %653 = vmatprep.subr.mxu0 0.0
    %654 = vmatpush1.msra.mxu0 0.0
    %655 = vmatprep.subr.mxu0 0.0
    %656 = vmatpush1.msra.mxu0 0.0
    %657 = vmatprep.subr.mxu0 0.0
    %658 = vmatpush1.msra.mxu0 0.0
    %659 = vmatprep.subr.mxu0 0.0
    %660 = vmatpush1.msra.mxu0 0.0
    %661 = vmatprep.subr.mxu0 0.0
    %662 = vmatpush1.msra.mxu0 0.0
    %663 = vmatprep.subr.mxu0 0.0
    %664 = vmatpush1.msra.mxu0 0.0
    %665 = vmatprep.subr.mxu0 0.0
    %666 = vmatpush1.msra.mxu0 0.0
    %667 = vmatprep.subr.mxu0 0.0
    %668 = vmatpush1.msra.mxu0 0.0
    %669 = vmatprep.subr.mxu0 0.0
    %670 = vmatpush1.msra.mxu0 0.0
    %671 = vmatprep.subr.mxu0 0.0
    %672 = vmatpush1.msra.mxu0 0.0
    %673 = vmatprep.mubr.f32.mxu0 0.0
    %674 = vmatmul.mubr.f32.gmra.mrb[0].mxu0 %v607
    %v675 = vpop.f32.mrb[0].mxu0
    %v676 = vadd.f32 %v603, %v675
    %v677 = vpop.f32.mrb[0].mxu0
    %678 = vdwg.mxu0
    %v679 = vmax.f32 %v676, 0.0
    %v680 = vld [vmem:[%s7] sm:$0xff]
    %v681 = vld [vmem:[%s7 + $0x8] sm:$0xff]
    %v682 = vld [vmem:[%s7 + $0x10] sm:$0xff]
    %v683 = vld [vmem:[%s7 + $0x18] sm:$0xff]
    %v684 = vld [vmem:[%s8] sm:$0x1]
    %v686 = vlaneseq
    %v687 = vshrl.u32 %v686, 7
    %v688 = vsub.s32 0, %v687
    %v689 = vrot.slane %v684, %v688
    %vm691 = vcmask 261120
    %v693 = vsel %vm691, %v679, 0
    %695 = vmatprep.subr.mxu0 0.0
    %696 = vmatpush1.msra.mxu0 %v680
    %697 = vmatprep.subr.mxu0 0.0
    %698 = vmatpush1.msra.mxu0 %v681
    %699 = vmatprep.subr.mxu0 0.0
    %700 = vmatpush1.msra.mxu0 %v682
    %701 = vmatprep.subr.mxu0 0.0
    %702 = vmatpush1.msra.mxu0 %v683
    %703 = vmatprep.subr.mxu0 0.0
    %704 = vmatpush1.msra.mxu0 0.0
    %705 = vmatprep.subr.mxu0 0.0
    %706 = vmatpush1.msra.mxu0 0.0
    %707 = vmatprep.subr.mxu0 0.0
    %708 = vmatpush1.msra.mxu0 0.0
    %709 = vmatprep.subr.mxu0 0.0
    %710 = vmatpush1.msra.mxu0 0.0
    %711 = vmatprep.subr.mxu0 0.0
    %712 = vmatpush1.msra.mxu0 0.0
    %713 = vmatprep.subr.mxu0 0.0
    %714 = vmatpush1.msra.mxu0 0.0
    %715 = vmatprep.subr.mxu0 0.0
    %716 = vmatpush1.msra.mxu0 0.0
    %717 = vmatprep.subr.mxu0 0.0
    %718 = vmatpush1.msra.mxu0 0.0
    %719 = vmatprep.subr.mxu0 0.0
    %720 = vmatpush1.msra.mxu0 0.0
    %721 = vmatprep.subr.mxu0 0.0
    %722 = vmatpush1.msra.mxu0 0.0
    %723 = vmatprep.subr.mxu0 0.0
    %724 = vmatpush1.msra.mxu0 0.0
    %725 = vmatprep.subr.mxu0 0.0
    %726 = vmatpush1.msra.mxu0 0.0
    %727 = vmatprep.subr.mxu0 0.0
    %728 = vmatpush1.msra.mxu0 0.0
    %729 = vmatprep.subr.mxu0 0.0
    %730 = vmatpush1.msra.mxu0 0.0
    %731 = vmatprep.subr.mxu0 0.0
    %732 = vmatpush1.msra.mxu0 0.0
    %733 = vmatprep.subr.mxu0 0.0
    %734 = vmatpush1.msra.mxu0 0.0
    %735 = vmatprep.subr.mxu0 0.0
    %736 = vmatpush1.msra.mxu0 0.0
    %737 = vmatprep.subr.mxu0 0.0
    %738 = vmatpush1.msra.mxu0 0.0
    %739 = vmatprep.subr.mxu0 0.0
    %740 = vmatpush1.msra.mxu0 0.0
    %741 = vmatprep.subr.mxu0 0.0
    %742 = vmatpush1.msra.mxu0 0.0
    %743 = vmatprep.subr.mxu0 0.0
    %744 = vmatpush1.msra.mxu0 0.0
    %745 = vmatprep.subr.mxu0 0.0
    %746 = vmatpush1.msra.mxu0 0.0
    %747 = vmatprep.subr.mxu0 0.0
    %748 = vmatpush1.msra.mxu0 0.0
    %749 = vmatprep.subr.mxu0 0.0
    %750 = vmatpush1.msra.mxu0 0.0
    %751 = vmatprep.subr.mxu0 0.0
    %752 = vmatpush1.msra.mxu0 0.0
    %753 = vmatprep.subr.mxu0 0.0
    %754 = vmatpush1.msra.mxu0 0.0
    %755 = vmatprep.subr.mxu0 0.0
    %756 = vmatpush1.msra.mxu0 0.0
    %757 = vmatprep.subr.mxu0 0.0
    %758 = vmatpush1.msra.mxu0 0.0
    %759 = vmatprep.mubr.f32.mxu0 0.0
    %760 = vmatmul.mubr.f32.gmra.mrb[0].mxu0 %v693
    %v761 = vpop.f32.mrb[0].mxu0
    %v762 = vadd.f32 %v689, %v761
    %v763 = vpop.f32.mrb[0].mxu0
    %764 = vdwg.mxu0
    %v765 = vmax.f32 %v762, 0.0
    %v766 = vld [vmem:[%s9] sm:$0xff]
    %v767 = vld [vmem:[%s9 + $0x8] sm:$0xff]
    %v768 = vld [vmem:[%s9 + $0x10] sm:$0xff]
    %v769 = vld [vmem:[%s9 + $0x18] sm:$0xff]
    %v770 = vld [vmem:[%s9 + $0x20] sm:$0xff]
    %v771 = vld [vmem:[%s9 + $0x28] sm:$0xff]
    %v772 = vld [vmem:[%s9 + $0x30] sm:$0xff]
    %v773 = vld [vmem:[%s9 + $0x38] sm:$0xff]
    %v774 = vld [vmem:[%s10] sm:$0x1]
    %v776 = vlaneseq
    %v777 = vshrl.u32 %v776, 7
    %v778 = vsub.s32 0, %v777
    %v779 = vrot.slane %v774, %v778
    %v782 = vsel %vm605, %v765, 0
    %784 = vmatprep.subr.mxu0 0.0
    %785 = vmatpush1.msra.mxu0 %v766
    %786 = vmatprep.subr.mxu0 0.0
    %787 = vmatpush1.msra.mxu0 %v767
    %788 = vmatprep.subr.mxu0 0.0
    %789 = vmatpush1.msra.mxu0 %v768
    %790 = vmatprep.subr.mxu0 0.0
    %791 = vmatpush1.msra.mxu0 %v769
    %792 = vmatprep.subr.mxu0 0.0
    %793 = vmatpush1.msra.mxu0 %v770
    %794 = vmatprep.subr.mxu0 0.0
    %795 = vmatpush1.msra.mxu0 %v771
    %796 = vmatprep.subr.mxu0 0.0
    %797 = vmatpush1.msra.mxu0 %v772
    %798 = vmatprep.subr.mxu0 0.0
    %799 = vmatpush1.msra.mxu0 %v773
    %800 = vmatprep.subr.mxu0 0.0
    %801 = vmatpush1.msra.mxu0 0.0
    %802 = vmatprep.subr.mxu0 0.0
    %803 = vmatpush1.msra.mxu0 0.0
    %804 = vmatprep.subr.mxu0 0.0
    %805 = vmatpush1.msra.mxu0 0.0
    %806 = vmatprep.subr.mxu0 0.0
    %807 = vmatpush1.msra.mxu0 0.0
    %808 = vmatprep.subr.mxu0 0.0
    %809 = vmatpush1.msra.mxu0 0.0
    %810 = vmatprep.subr.mxu0 0.0
    %811 = vmatpush1.msra.mxu0 0.0
    %812 = vmatprep.subr.mxu0 0.0
    %813 = vmatpush1.msra.mxu0 0.0
    %814 = vmatprep.subr.mxu0 0.0
    %815 = vmatpush1.msra.mxu0 0.0
    %816 = vmatprep.subr.mxu0 0.0
    %817 = vmatpush1.msra.mxu0 0.0
    %818 = vmatprep.subr.mxu0 0.0
    %819 = vmatpush1.msra.mxu0 0.0
    %820 = vmatprep.subr.mxu0 0.0
    %821 = vmatpush1.msra.mxu0 0.0
    %822 = vmatprep.subr.mxu0 0.0
    %823 = vmatpush1.msra.mxu0 0.0
    %824 = vmatprep.subr.mxu0 0.0
    %825 = vmatpush1.msra.mxu0 0.0
    %826 = vmatprep.subr.mxu0 0.0
    %827 = vmatpush1.msra.mxu0 0.0
    %828 = vmatprep.subr.mxu0 0.0
    %829 = vmatpush1.msra.mxu0 0.0
    %830 = vmatprep.subr.mxu0 0.0
    %831 = vmatpush1.msra.mxu0 0.0
    %832 = vmatprep.subr.mxu0 0.0
    %833 = vmatpush1.msra.mxu0 0.0
    %834 = vmatprep.subr.mxu0 0.0
    %835 = vmatpush1.msra.mxu0 0.0
    %836 = vmatprep.subr.mxu0 0.0
    %837 = vmatpush1.msra.mxu0 0.0
    %838 = vmatprep.subr.mxu0 0.0
    %839 = vmatpush1.msra.mxu0 0.0
    %840 = vmatprep.subr.mxu0 0.0
    %841 = vmatpush1.msra.mxu0 0.0
    %842 = vmatprep.subr.mxu0 0.0
    %843 = vmatpush1.msra.mxu0 0.0
    %844 = vmatprep.subr.mxu0 0.0
    %845 = vmatpush1.msra.mxu0 0.0
    %846 = vmatprep.subr.mxu0 0.0
    %847 = vmatpush1.msra.mxu0 0.0
    %848 = vmatprep.mubr.f32.mxu0 0.0
    %849 = vmatmul.mubr.f32.gmra.mrb[0].mxu0 %v782
    %v850 = vpop.f32.mrb[0].mxu0
    %v851 = vadd.f32 %v779, %v850
    %v852 = vpop.f32.mrb[0].mxu0
    %853 = vdwg.mxu0
    %v854 = vmax.f32 %v851, 0.0
    %v855 = vld [vmem:[#allocation4] sm:$0xff]
    %v856 = vld [vmem:[#allocation4 + $0x8] sm:$0xff]
    %v857 = vld [vmem:[#allocation4 + $0x10] sm:$0xff]
    %v858 = vld [vmem:[#allocation4 + $0x18] sm:$0xff]
    %v859 = vld [vmem:[#allocation4 + $0x20] sm:$0xff]
    %v860 = vld [vmem:[#allocation4 + $0x28] sm:$0xff]
    %v861 = vld [vmem:[#allocation4 + $0x30] sm:$0xff]
    %v862 = vld [vmem:[#allocation4 + $0x38] sm:$0xff]
    %v863 = vld [vmem:[#allocation4 + $0x40] sm:$0xff]
    %v864 = vld [vmem:[#allocation4 + $0x48] sm:$0xff]
    %v865 = vld [vmem:[#allocation4 + $0x50] sm:$0xff]
    %v866 = vld [vmem:[#allocation4 + $0x58] sm:$0xff]
    %v867 = vld [vmem:[#allocation4 + $0x60] sm:$0xff]
    %v868 = vld [vmem:[#allocation4 + $0x68] sm:$0xff]
    %v869 = vld [vmem:[#allocation4 + $0x70] sm:$0xff]
    %v870 = vld [vmem:[#allocation4 + $0x78] sm:$0xff]
    %v871 = vld [vmem:[#allocation4 + $0x80] sm:$0xff]
    %v872 = vld [vmem:[#allocation4 + $0x88] sm:$0xff]
    %v873 = vld [vmem:[#allocation4 + $0x90] sm:$0xff]
    %v874 = vld [vmem:[#allocation4 + $0x98] sm:$0xff]
    %v875 = vld [vmem:[#allocation4 + $0xa0] sm:$0xff]
    %v876 = vld [vmem:[#allocation4 + $0xa8] sm:$0xff]
    %v877 = vld [vmem:[#allocation4 + $0xb0] sm:$0xff]
    %v878 = vld [vmem:[#allocation4 + $0xb8] sm:$0xff]
    %v879 = vld [vmem:[#allocation4 + $0xc0] sm:$0xff]
    %v880 = vld [vmem:[#allocation4 + $0xc8] sm:$0xff]
    %v881 = vld [vmem:[#allocation4 + $0xd0] sm:$0xff]
    %v882 = vld [vmem:[#allocation4 + $0xd8] sm:$0xff]
    %v883 = vld [vmem:[#allocation4 + $0xe0] sm:$0xff]
    %v884 = vld [vmem:[#allocation4 + $0xe8] sm:$0xff]
    %v885 = vld [vmem:[#allocation4 + $0xf0] sm:$0xff]
    %v886 = vld [vmem:[#allocation4 + $0xf8] sm:$0xff]
    %v887 = vld [vmem:[#allocation4 + $0x100] sm:$0xff]
    %v888 = vld [vmem:[#allocation4 + $0x108] sm:$0xff]
    %v889 = vld [vmem:[#allocation4 + $0x110] sm:$0xff]
    %v890 = vld [vmem:[#allocation4 + $0x118] sm:$0xff]
    %v891 = vld [vmem:[#allocation4 + $0x120] sm:$0xff]
    %v892 = vld [vmem:[#allocation4 + $0x128] sm:$0xff]
    %v893 = vld [vmem:[#allocation4 + $0x130] sm:$0xff]
    %v894 = vld [vmem:[#allocation4 + $0x138] sm:$0xff]
    %v895 = vld [vmem:[#allocation4 + $0x140] sm:$0xff]
    %v896 = vld [vmem:[#allocation4 + $0x148] sm:$0xff]
    %v897 = vld [vmem:[#allocation4 + $0x150] sm:$0xff]
    %v898 = vld [vmem:[#allocation4 + $0x158] sm:$0xff]
    %v899 = vld [vmem:[#allocation4 + $0x160] sm:$0xff]
    %v900 = vld [vmem:[#allocation4 + $0x168] sm:$0xff]
    %v901 = vld [vmem:[#allocation4 + $0x170] sm:$0xff]
    %v902 = vld [vmem:[#allocation4 + $0x178] sm:$0xff]
    %v903 = vld [vmem:[#allocation4 + $0x180] sm:$0xff]
    %v904 = vld [vmem:[#allocation4 + $0x188] sm:$0xff]
    %v905 = vld [vmem:[#allocation4 + $0x190] sm:$0xff]
    %v906 = vld [vmem:[#allocation4 + $0x198] sm:$0xff]
    %v907 = vld [vmem:[#allocation4 + $0x1a0] sm:$0xff]
    %v908 = vld [vmem:[#allocation4 + $0x1a8] sm:$0xff]
    %v909 = vld [vmem:[#allocation4 + $0x1b0] sm:$0xff]
    %v910 = vld [vmem:[#allocation4 + $0x1b8] sm:$0xff]
    %v911 = vld [vmem:[#allocation4 + $0x1c0] sm:$0xff]
    %v912 = vld [vmem:[#allocation4 + $0x1c8] sm:$0xff]
    %v913 = vld [vmem:[#allocation4 + $0x1d0] sm:$0xff]
    %v914 = vld [vmem:[#allocation4 + $0x1d8] sm:$0xff]
    %v915 = vld [vmem:[#allocation4 + $0x1e0] sm:$0xff]
    %v916 = vld [vmem:[#allocation4 + $0x1e8] sm:$0xff]
    %v917 = vld [vmem:[#allocation4 + $0x1f0] sm:$0xff]
    %v918 = vld [vmem:[#allocation4 + $0x1f8] sm:$0xff]
    %v919 = vld [vmem:[#allocation4 + $0x200] sm:$0xff]
    %v920 = vld [vmem:[#allocation4 + $0x208] sm:$0xff]
    %v921 = vld [vmem:[#allocation4 + $0x210] sm:$0xff]
    %v922 = vld [vmem:[#allocation4 + $0x218] sm:$0xff]
    %v923 = vld [vmem:[#allocation4 + $0x220] sm:$0xff]
    %v924 = vld [vmem:[#allocation4 + $0x228] sm:$0xff]
    %v925 = vld [vmem:[#allocation4 + $0x230] sm:$0xff]
    %v926 = vld [vmem:[#allocation4 + $0x238] sm:$0xff]
    %v927 = vld [vmem:[#allocation4 + $0x240] sm:$0xff]
    %v928 = vld [vmem:[#allocation4 + $0x248] sm:$0xff]
    %v929 = vld [vmem:[#allocation4 + $0x250] sm:$0xff]
    %v930 = vld [vmem:[#allocation4 + $0x258] sm:$0xff]
    %v931 = vld [vmem:[#allocation4 + $0x260] sm:$0xff]
    %v932 = vld [vmem:[#allocation4 + $0x268] sm:$0xff]
    %v933 = vld [vmem:[#allocation4 + $0x270] sm:$0xff]
    %v934 = vld [vmem:[#allocation4 + $0x278] sm:$0xff]
    %v935 = vld [vmem:[#allocation4 + $0x280] sm:$0xff]
    %v936 = vld [vmem:[#allocation4 + $0x288] sm:$0xff]
    %v937 = vld [vmem:[#allocation4 + $0x290] sm:$0xff]
    %v938 = vld [vmem:[#allocation4 + $0x298] sm:$0xff]
    %v939 = vld [vmem:[#allocation4 + $0x2a0] sm:$0xff]
    %v940 = vld [vmem:[#allocation4 + $0x2a8] sm:$0xff]
    %v941 = vld [vmem:[#allocation4 + $0x2b0] sm:$0xff]
    %v942 = vld [vmem:[#allocation4 + $0x2b8] sm:$0xff]
    %v943 = vld [vmem:[#allocation4 + $0x2c0] sm:$0xff]
    %v944 = vld [vmem:[#allocation4 + $0x2c8] sm:$0xff]
    %v945 = vld [vmem:[#allocation4 + $0x2d0] sm:$0xff]
    %v946 = vld [vmem:[#allocation4 + $0x2d8] sm:$0xff]
    %v947 = vld [vmem:[#allocation4 + $0x2e0] sm:$0xff]
    %v948 = vld [vmem:[#allocation4 + $0x2e8] sm:$0xff]
    %v949 = vld [vmem:[#allocation4 + $0x2f0] sm:$0xff]
    %v950 = vld [vmem:[#allocation4 + $0x2f8] sm:$0xff]
    %v951 = vld [vmem:[#allocation4 + $0x300] sm:$0xff]
    %v952 = vld [vmem:[#allocation4 + $0x308] sm:$0xff]
    %v953 = vld [vmem:[#allocation4 + $0x310] sm:$0xff]
    %v954 = vld [vmem:[#allocation4 + $0x318] sm:$0xff]
    %v955 = vld [vmem:[#allocation4 + $0x320] sm:$0xff]
    %v956 = vld [vmem:[#allocation4 + $0x328] sm:$0xff]
    %v957 = vld [vmem:[#allocation4 + $0x330] sm:$0xff]
    %v958 = vld [vmem:[#allocation4 + $0x338] sm:$0xff]
    %v959 = vld [vmem:[#allocation4 + $0x340] sm:$0xff]
    %v960 = vld [vmem:[#allocation4 + $0x348] sm:$0xff]
    %v961 = vld [vmem:[#allocation4 + $0x350] sm:$0xff]
    %v962 = vld [vmem:[#allocation4 + $0x358] sm:$0xff]
    %v963 = vld [vmem:[#allocation4 + $0x360] sm:$0xff]
    %v964 = vld [vmem:[#allocation4 + $0x368] sm:$0xff]
    %v965 = vld [vmem:[#allocation4 + $0x370] sm:$0xff]
    %v966 = vld [vmem:[#allocation4 + $0x378] sm:$0xff]
    %v967 = vld [vmem:[#allocation4 + $0x380] sm:$0xff]
    %v968 = vld [vmem:[#allocation4 + $0x388] sm:$0xff]
    %v969 = vld [vmem:[#allocation4 + $0x390] sm:$0xff]
    %v970 = vld [vmem:[#allocation4 + $0x398] sm:$0xff]
    %v971 = vld [vmem:[#allocation4 + $0x3a0] sm:$0xff]
    %v972 = vld [vmem:[#allocation4 + $0x3a8] sm:$0xff]
    %v973 = vld [vmem:[#allocation4 + $0x3b0] sm:$0xff]
    %v974 = vld [vmem:[#allocation4 + $0x3b8] sm:$0xff]
    %v975 = vld [vmem:[#allocation4 + $0x3c0] sm:$0xff]
    %v976 = vld [vmem:[#allocation4 + $0x3c8] sm:$0xff]
    %v977 = vld [vmem:[#allocation4 + $0x3d0] sm:$0xff]
    %v978 = vld [vmem:[#allocation4 + $0x3d8] sm:$0xff]
    %v979 = vld [vmem:[#allocation4 + $0x3e0] sm:$0xff]
    %v980 = vld [vmem:[#allocation4 + $0x3e8] sm:$0xff]
    %v981 = vld [vmem:[#allocation4 + $0x3f0] sm:$0xff]
    %v982 = vld [vmem:[#allocation4 + $0x3f8] sm:$0xff]
    %v983 = vld [vmem:[%s12] sm:$0xff]
    %v985 = vlaneseq
    %v986 = vshrl.u32 %v985, 7
    %v987 = vsub.s32 0, %v986
    %v988 = vrot.slane %v983, %v987
    %v989 = vlaneseq
    %v990 = vshrl.u32 %v989, 7
    %v991 = vsub.s32 1, %v990
    %v992 = vrot.slane %v983, %v991
    %v993 = vlaneseq
    %v994 = vshrl.u32 %v993, 7
    %v995 = vsub.s32 2, %v994
    %v996 = vrot.slane %v983, %v995
    %v997 = vlaneseq
    %v998 = vshrl.u32 %v997, 7
    %v999 = vsub.s32 3, %v998
    %v1000 = vrot.slane %v983, %v999
    %v1001 = vlaneseq
    %v1002 = vshrl.u32 %v1001, 7
    %v1003 = vsub.s32 4, %v1002
    %v1004 = vrot.slane %v983, %v1003
    %v1005 = vlaneseq
    %v1006 = vshrl.u32 %v1005, 7
    %v1007 = vsub.s32 5, %v1006
    %v1008 = vrot.slane %v983, %v1007
    %v1009 = vlaneseq
    %v1010 = vshrl.u32 %v1009, 7
    %v1011 = vsub.s32 6, %v1010
    %v1012 = vrot.slane %v983, %v1011
    %v1013 = vlaneseq
    %v1014 = vshrl.u32 %v1013, 7
    %v1015 = vsub.s32 7, %v1014
    %v1016 = vrot.slane %v983, %v1015
    %1025 = vmatprep.subr.mxu0 %v856
    %1026 = vmatpush1.msra.mxu0 %v855
    %1027 = vmatprep.subr.mxu0 %v864
    %1028 = vmatpush1.msra.mxu0 %v863
    %1029 = vmatprep.subr.mxu0 %v872
    %1030 = vmatpush1.msra.mxu0 %v871
    %1031 = vmatprep.subr.mxu0 %v880
    %1032 = vmatpush1.msra.mxu0 %v879
    %1033 = vmatprep.subr.mxu0 %v888
    %1034 = vmatpush1.msra.mxu0 %v887
    %1035 = vmatprep.subr.mxu0 %v896
    %1036 = vmatpush1.msra.mxu0 %v895
    %1037 = vmatprep.subr.mxu0 %v904
    %1038 = vmatpush1.msra.mxu0 %v903
    %1039 = vmatprep.subr.mxu0 %v912
    %1040 = vmatpush1.msra.mxu0 %v911
    %1041 = vmatprep.subr.mxu0 %v920
    %1042 = vmatpush1.msra.mxu0 %v919
    %1043 = vmatprep.subr.mxu0 %v928
    %1044 = vmatpush1.msra.mxu0 %v927
    %1045 = vmatprep.subr.mxu0 %v936
    %1046 = vmatpush1.msra.mxu0 %v935
    %1047 = vmatprep.subr.mxu0 %v944
    %1048 = vmatpush1.msra.mxu0 %v943
    %1049 = vmatprep.subr.mxu0 %v952
    %1050 = vmatpush1.msra.mxu0 %v951
    %1051 = vmatprep.subr.mxu0 %v960
    %1052 = vmatpush1.msra.mxu0 %v959
    %1053 = vmatprep.subr.mxu0 %v968
    %1054 = vmatpush1.msra.mxu0 %v967
    %1055 = vmatprep.subr.mxu0 %v976
    %1056 = vmatpush1.msra.mxu0 %v975
    %1057 = vmatprep.subr.mxu0 0.0
    %1058 = vmatpush1.msra.mxu0 0.0
    %1059 = vmatprep.subr.mxu0 0.0
    %1060 = vmatpush1.msra.mxu0 0.0
    %1061 = vmatprep.subr.mxu0 0.0
    %1062 = vmatpush1.msra.mxu0 0.0
    %1063 = vmatprep.subr.mxu0 0.0
    %1064 = vmatpush1.msra.mxu0 0.0
    %1065 = vmatprep.subr.mxu0 0.0
    %1066 = vmatpush1.msra.mxu0 0.0
    %1067 = vmatprep.subr.mxu0 0.0
    %1068 = vmatpush1.msra.mxu0 0.0
    %1069 = vmatprep.subr.mxu0 0.0
    %1070 = vmatpush1.msra.mxu0 0.0
    %1071 = vmatprep.subr.mxu0 0.0
    %1072 = vmatpush1.msra.mxu0 0.0
    %1073 = vmatprep.subr.mxu0 0.0
    %1074 = vmatpush1.msra.mxu0 0.0
    %1075 = vmatprep.subr.mxu0 0.0
    %1076 = vmatpush1.msra.mxu0 0.0
    %1077 = vmatprep.subr.mxu0 0.0
    %1078 = vmatpush1.msra.mxu0 0.0
    %1079 = vmatprep.subr.mxu0 0.0
    %1080 = vmatpush1.msra.mxu0 0.0
    %1081 = vmatprep.subr.mxu0 0.0
    %1082 = vmatpush1.msra.mxu0 0.0
    %1083 = vmatprep.subr.mxu0 0.0
    %1084 = vmatpush1.msra.mxu0 0.0
    %1085 = vmatprep.subr.mxu0 0.0
    %1086 = vmatpush1.msra.mxu0 0.0
    %1087 = vmatprep.subr.mxu0 0.0
    %1088 = vmatpush1.msra.mxu0 0.0
    %1089 = vmatprep.mubr.f32.mxu0 0.0
    %1090 = vmatmul.mubr.f32.gmra.mrb[0].mxu0 %v854
    %v1091 = vpop.f32.mrb[0].mxu0
    %v1092 = vadd.f32 %v988, %v1091
    %v1093 = vpop.f32.mrb[0].mxu0
    %v1094 = vadd.f32 %v992, %v1093
    %1095 = vdwg.mxu0
    %1096 = vmatprep.subr.mxu0 %v858
    %1097 = vmatpush1.msra.mxu0 %v857
    %1098 = vmatprep.subr.mxu0 %v866
    %1099 = vmatpush1.msra.mxu0 %v865
    %1100 = vmatprep.subr.mxu0 %v874
    %1101 = vmatpush1.msra.mxu0 %v873
    %1102 = vmatprep.subr.mxu0 %v882
    %1103 = vmatpush1.msra.mxu0 %v881
    %1104 = vmatprep.subr.mxu0 %v890
    %1105 = vmatpush1.msra.mxu0 %v889
    %1106 = vmatprep.subr.mxu0 %v898
    %1107 = vmatpush1.msra.mxu0 %v897
    %1108 = vmatprep.subr.mxu0 %v906
    %1109 = vmatpush1.msra.mxu0 %v905
    %1110 = vmatprep.subr.mxu0 %v914
    %1111 = vmatpush1.msra.mxu0 %v913
    %1112 = vmatprep.subr.mxu0 %v922
    %1113 = vmatpush1.msra.mxu0 %v921
    %1114 = vmatprep.subr.mxu0 %v930
    %1115 = vmatpush1.msra.mxu0 %v929
    %1116 = vmatprep.subr.mxu0 %v938
    %1117 = vmatpush1.msra.mxu0 %v937
    %1118 = vmatprep.subr.mxu0 %v946
    %1119 = vmatpush1.msra.mxu0 %v945
    %1120 = vmatprep.subr.mxu0 %v954
    %1121 = vmatpush1.msra.mxu0 %v953
    %1122 = vmatprep.subr.mxu0 %v962
    %1123 = vmatpush1.msra.mxu0 %v961
    %1124 = vmatprep.subr.mxu0 %v970
    %1125 = vmatpush1.msra.mxu0 %v969
    %1126 = vmatprep.subr.mxu0 %v978
    %1127 = vmatpush1.msra.mxu0 %v977
    %1128 = vmatprep.subr.mxu0 0.0
    %1129 = vmatpush1.msra.mxu0 0.0
    %1130 = vmatprep.subr.mxu0 0.0
    %1131 = vmatpush1.msra.mxu0 0.0
    %1132 = vmatprep.subr.mxu0 0.0
    %1133 = vmatpush1.msra.mxu0 0.0
    %1134 = vmatprep.subr.mxu0 0.0
    %1135 = vmatpush1.msra.mxu0 0.0
    %1136 = vmatprep.subr.mxu0 0.0
    %1137 = vmatpush1.msra.mxu0 0.0
    %1138 = vmatprep.subr.mxu0 0.0
    %1139 = vmatpush1.msra.mxu0 0.0
    %1140 = vmatprep.subr.mxu0 0.0
    %1141 = vmatpush1.msra.mxu0 0.0
    %1142 = vmatprep.subr.mxu0 0.0
    %1143 = vmatpush1.msra.mxu0 0.0
    %1144 = vmatprep.subr.mxu0 0.0
    %1145 = vmatpush1.msra.mxu0 0.0
    %1146 = vmatprep.subr.mxu0 0.0
    %1147 = vmatpush1.msra.mxu0 0.0
    %1148 = vmatprep.subr.mxu0 0.0
    %1149 = vmatpush1.msra.mxu0 0.0
    %1150 = vmatprep.subr.mxu0 0.0
    %1151 = vmatpush1.msra.mxu0 0.0
    %1152 = vmatprep.subr.mxu0 0.0
    %1153 = vmatpush1.msra.mxu0 0.0
    %1154 = vmatprep.subr.mxu0 0.0
    %1155 = vmatpush1.msra.mxu0 0.0
    %1156 = vmatprep.subr.mxu0 0.0
    %1157 = vmatpush1.msra.mxu0 0.0
    %1158 = vmatprep.subr.mxu0 0.0
    %1159 = vmatpush1.msra.mxu0 0.0
    %1160 = vmatprep.mubr.f32.mxu0 0.0
    %1161 = vmatmul.mubr.f32.gmra.mrb[0].mxu0 %v854
    %v1162 = vpop.f32.mrb[0].mxu0
    %v1163 = vadd.f32 %v996, %v1162
    %v1164 = vpop.f32.mrb[0].mxu0
    %v1165 = vadd.f32 %v1000, %v1164
    %1166 = vdwg.mxu0
    %1167 = vmatprep.subr.mxu0 %v860
    %1168 = vmatpush1.msra.mxu0 %v859
    %1169 = vmatprep.subr.mxu0 %v868
    %1170 = vmatpush1.msra.mxu0 %v867
    %1171 = vmatprep.subr.mxu0 %v876
    %1172 = vmatpush1.msra.mxu0 %v875
    %1173 = vmatprep.subr.mxu0 %v884
    %1174 = vmatpush1.msra.mxu0 %v883
    %1175 = vmatprep.subr.mxu0 %v892
    %1176 = vmatpush1.msra.mxu0 %v891
    %1177 = vmatprep.subr.mxu0 %v900
    %1178 = vmatpush1.msra.mxu0 %v899
    %1179 = vmatprep.subr.mxu0 %v908
    %1180 = vmatpush1.msra.mxu0 %v907
    %1181 = vmatprep.subr.mxu0 %v916
    %1182 = vmatpush1.msra.mxu0 %v915
    %1183 = vmatprep.subr.mxu0 %v924
    %1184 = vmatpush1.msra.mxu0 %v923
    %1185 = vmatprep.subr.mxu0 %v932
    %1186 = vmatpush1.msra.mxu0 %v931
    %1187 = vmatprep.subr.mxu0 %v940
    %1188 = vmatpush1.msra.mxu0 %v939
    %1189 = vmatprep.subr.mxu0 %v948
    %1190 = vmatpush1.msra.mxu0 %v947
    %1191 = vmatprep.subr.mxu0 %v956
    %1192 = vmatpush1.msra.mxu0 %v955
    %1193 = vmatprep.subr.mxu0 %v964
    %1194 = vmatpush1.msra.mxu0 %v963
    %1195 = vmatprep.subr.mxu0 %v972
    %1196 = vmatpush1.msra.mxu0 %v971
    %1197 = vmatprep.subr.mxu0 %v980
    %1198 = vmatpush1.msra.mxu0 %v979
    %1199 = vmatprep.subr.mxu0 0.0
    %1200 = vmatpush1.msra.mxu0 0.0
    %1201 = vmatprep.subr.mxu0 0.0
    %1202 = vmatpush1.msra.mxu0 0.0
    %1203 = vmatprep.subr.mxu0 0.0
    %1204 = vmatpush1.msra.mxu0 0.0
    %1205 = vmatprep.subr.mxu0 0.0
    %1206 = vmatpush1.msra.mxu0 0.0
    %1207 = vmatprep.subr.mxu0 0.0
    %1208 = vmatpush1.msra.mxu0 0.0
    %1209 = vmatprep.subr.mxu0 0.0
    %1210 = vmatpush1.msra.mxu0 0.0
    %1211 = vmatprep.subr.mxu0 0.0
    %1212 = vmatpush1.msra.mxu0 0.0
    %1213 = vmatprep.subr.mxu0 0.0
    %1214 = vmatpush1.msra.mxu0 0.0
    %1215 = vmatprep.subr.mxu0 0.0
    %1216 = vmatpush1.msra.mxu0 0.0
    %1217 = vmatprep.subr.mxu0 0.0
    %1218 = vmatpush1.msra.mxu0 0.0
    %1219 = vmatprep.subr.mxu0 0.0
    %1220 = vmatpush1.msra.mxu0 0.0
    %1221 = vmatprep.subr.mxu0 0.0
    %1222 = vmatpush1.msra.mxu0 0.0
    %1223 = vmatprep.subr.mxu0 0.0
    %1224 = vmatpush1.msra.mxu0 0.0
    %1225 = vmatprep.subr.mxu0 0.0
    %1226 = vmatpush1.msra.mxu0 0.0
    %1227 = vmatprep.subr.mxu0 0.0
    %1228 = vmatpush1.msra.mxu0 0.0
    %1229 = vmatprep.subr.mxu0 0.0
    %1230 = vmatpush1.msra.mxu0 0.0
    %1231 = vmatprep.mubr.f32.mxu0 0.0
    %1232 = vmatmul.mubr.f32.gmra.mrb[0].mxu0 %v854
    %v1233 = vpop.f32.mrb[0].mxu0
    %v1234 = vadd.f32 %v1004, %v1233
    %v1235 = vpop.f32.mrb[0].mxu0
    %v1236 = vadd.f32 %v1008, %v1235
    %1237 = vdwg.mxu0
    %1238 = vmatprep.subr.mxu0 %v862
    %1239 = vmatpush1.msra.mxu0 %v861
    %1240 = vmatprep.subr.mxu0 %v870
    %1241 = vmatpush1.msra.mxu0 %v869
    %1242 = vmatprep.subr.mxu0 %v878
    %1243 = vmatpush1.msra.mxu0 %v877
    %1244 = vmatprep.subr.mxu0 %v886
    %1245 = vmatpush1.msra.mxu0 %v885
    %1246 = vmatprep.subr.mxu0 %v894
    %1247 = vmatpush1.msra.mxu0 %v893
    %1248 = vmatprep.subr.mxu0 %v902
    %1249 = vmatpush1.msra.mxu0 %v901
    %1250 = vmatprep.subr.mxu0 %v910
    %1251 = vmatpush1.msra.mxu0 %v909
    %1252 = vmatprep.subr.mxu0 %v918
    %1253 = vmatpush1.msra.mxu0 %v917
    %1254 = vmatprep.subr.mxu0 %v926
    %1255 = vmatpush1.msra.mxu0 %v925
    %1256 = vmatprep.subr.mxu0 %v934
    %1257 = vmatpush1.msra.mxu0 %v933
    %1258 = vmatprep.subr.mxu0 %v942
    %1259 = vmatpush1.msra.mxu0 %v941
    %1260 = vmatprep.subr.mxu0 %v950
    %1261 = vmatpush1.msra.mxu0 %v949
    %1262 = vmatprep.subr.mxu0 %v958
    %1263 = vmatpush1.msra.mxu0 %v957
    %1264 = vmatprep.subr.mxu0 %v966
    %1265 = vmatpush1.msra.mxu0 %v965
    %1266 = vmatprep.subr.mxu0 %v974
    %1267 = vmatpush1.msra.mxu0 %v973
    %1268 = vmatprep.subr.mxu0 %v982
    %1269 = vmatpush1.msra.mxu0 %v981
    %1270 = vmatprep.subr.mxu0 0.0
    %1271 = vmatpush1.msra.mxu0 0.0
    %1272 = vmatprep.subr.mxu0 0.0
    %1273 = vmatpush1.msra.mxu0 0.0
    %1274 = vmatprep.subr.mxu0 0.0
    %1275 = vmatpush1.msra.mxu0 0.0
    %1276 = vmatprep.subr.mxu0 0.0
    %1277 = vmatpush1.msra.mxu0 0.0
    %1278 = vmatprep.subr.mxu0 0.0
    %1279 = vmatpush1.msra.mxu0 0.0
    %1280 = vmatprep.subr.mxu0 0.0
    %1281 = vmatpush1.msra.mxu0 0.0
    %1282 = vmatprep.subr.mxu0 0.0
    %1283 = vmatpush1.msra.mxu0 0.0
    %1284 = vmatprep.subr.mxu0 0.0
    %1285 = vmatpush1.msra.mxu0 0.0
    %1286 = vmatprep.subr.mxu0 0.0
    %1287 = vmatpush1.msra.mxu0 0.0
    %1288 = vmatprep.subr.mxu0 0.0
    %1289 = vmatpush1.msra.mxu0 0.0
    %1290 = vmatprep.subr.mxu0 0.0
    %1291 = vmatpush1.msra.mxu0 0.0
    %1292 = vmatprep.subr.mxu0 0.0
    %1293 = vmatpush1.msra.mxu0 0.0
    %1294 = vmatprep.subr.mxu0 0.0
    %1295 = vmatpush1.msra.mxu0 0.0
    %1296 = vmatprep.subr.mxu0 0.0
    %1297 = vmatpush1.msra.mxu0 0.0
    %1298 = vmatprep.subr.mxu0 0.0
    %1299 = vmatpush1.msra.mxu0 0.0
    %1300 = vmatprep.subr.mxu0 0.0
    %1301 = vmatpush1.msra.mxu0 0.0
    %1302 = vmatprep.mubr.f32.mxu0 0.0
    %1303 = vmatmul.mubr.f32.gmra.mrb[0].mxu0 %v854
    %v1304 = vpop.f32.mrb[0].mxu0
    %v1305 = vadd.f32 %v1012, %v1304
    %v1306 = vpop.f32.mrb[0].mxu0
    %v1307 = vadd.f32 %v1016, %v1306
    %1308 = vdwg.mxu0
    %v1309 = vmax.f32 %v1092, 0.0
    %v1310 = vmax.f32 %v1094, 0.0
    %v1311 = vmax.f32 %v1163, 0.0
    %v1312 = vmax.f32 %v1165, 0.0
    %v1313 = vmax.f32 %v1234, 0.0
    %v1314 = vmax.f32 %v1236, 0.0
    %v1315 = vmax.f32 %v1305, 0.0
    %v1316 = vmax.f32 %v1307, 0.0
    %1317 = vst [vmem:[%s13] sm:$0xff] %v1309
    %1318 = vst [vmem:[%s13 + $0x8] sm:$0xff] %v1310
    %1319 = vst [vmem:[%s13 + $0x10] sm:$0xff] %v1311
    %1320 = vst [vmem:[%s13 + $0x18] sm:$0xff] %v1312
    %1321 = vst [vmem:[%s13 + $0x20] sm:$0xff] %v1313
    %1322 = vst [vmem:[%s13 + $0x28] sm:$0xff] %v1314
    %1323 = vst [vmem:[%s13 + $0x30] sm:$0xff] %v1315
    %1324 = vst [vmem:[%s13 + $0x38] sm:$0xff] %v1316
    // Predicated region
    $region62: #{autoencoder_forward.1} parent=1 // pred_check
      _
    $region63: #{autoencoder_forward.1} parent=1 // pred_check_branch
      %1326 = sbr.rel (0) target = $region65
    $region64: #{autoencoder_forward.1} parent=1 // pred_region
      _
    $region65: #{autoencoder_forward.1} parent=1 // pred_fallthru
      _
    // Predicated region
    $region66: #{autoencoder_forward.1} parent=1 // pred_check
      _
    $region67: #{autoencoder_forward.1} parent=1 // pred_check_branch
      %1328 = sbr.rel (0) target = $region69
    $region68: #{autoencoder_forward.1} parent=1 // pred_region
      _
    $region69: #{autoencoder_forward.1} parent=1 // pred_fallthru
      _
    %1329 = vsyncpa [#allocation3], 1
    %1330 = vsyncpa [#allocation5], 1

</llo_original>
